<compile_context>
chip_gen: v6e
topology: v6e:2x2x1
jax: 0.10.0
libtpu: 0.0.40
codegen_flags: <defaults>
</compile_context>

<pallas_src>
import functools

import numpy as np
import jax
import jax.numpy as jnp
from jax import lax
from jax.experimental import pallas as pl
from jax.experimental.pallas import tpu as pltpu

EPS = 1e-5


def _round_up(x, n):
    return -(-x // n) * n


def _pick_tile_m(m, max_tile=512):
    """Rows per grid step. Large tiles amortize the ~0.35us per-step overhead, but keep
    >=2 grid steps when possible (v7x megacore sharding + input/output pipelining)."""
    max_tile = max(128, (max_tile // 128) * 128)
    if m <= 128:
        return max(16, _round_up(m, 16))          # single full-extent block
    half = _round_up(_round_up(m, 2) // 2, 128)   # ~m/2, multiple of 128
    return int(min(max_tile, max(128, half)))


# ------------------------------ fused kernel ------------------------------------
def _ffn_fused_kernel(*refs, nlayers, residual):
    # refs = [x, w0, b0, P] + nlayers*[gamma, beta, w, b] + [wy_t, by] + [out_t]
    x_ref, w0_ref, b0_ref, p_ref = refs[:4]
    layer_refs = refs[4:4 + 4 * nlayers]
    wyt_ref, by_ref, o_ref = refs[4 + 4 * nlayers:]

    x = x_ref[...].astype(jnp.float32)                              # (TM, nin)
    h = jnp.dot(x, w0_ref[...].astype(jnp.float32),
                preferred_element_type=jnp.float32)
    h = h + b0_ref[...].astype(jnp.float32)                         # l0

    p = p_ref[...]                                                  # (C, C) f32, group-mean proj
    for l in range(nlayers):
        gamma = layer_refs[4 * l + 0][...].astype(jnp.float32)      # (1, C)
        beta = layer_refs[4 * l + 1][...].astype(jnp.float32)       # (1, C)
        w = layer_refs[4 * l + 2][...].astype(jnp.float32)          # (C, C)
        b = layer_refs[4 * l + 3][...].astype(jnp.float32)          # (1, C)

        mean = jnp.dot(h, p, preferred_element_type=jnp.float32)    # group mean per channel
        hc = h - mean
        var = jnp.dot(hc * hc, p, preferred_element_type=jnp.float32)  # two-pass centered var
        y = hc * lax.rsqrt(var + EPS) * gamma + beta                # affine GroupNorm
        y = y * jax.nn.sigmoid(y)                                   # SiLU (f32, v5e-safe)
        t = jnp.dot(y, w, preferred_element_type=jnp.float32) + b   # Linear
        h = h + t if residual else t                                # mlp_type='resnet' residual

    # act_last + final Linear, emitted transposed (nout, TM) so the HBM store is
    # lane-dense (TM is a multiple of 128; nout may be < 128).
    y = h * jax.nn.sigmoid(h)
    wyt = wyt_ref[...].astype(jnp.float32)                          # (nout, C)
    out_t = lax.dot_general(wyt, y, (((1,), (1,)), ((), ())),
                            preferred_element_type=jnp.float32)     # (nout, TM)
    out_t = out_t + by_ref[...].astype(jnp.float32)                 # (nout, 1) broadcast
    o_ref[...] = out_t.astype(o_ref.dtype)


# ------------------------------ module wrapper ----------------------------------
def ffn_forward(x, params, *, mlp_type="fc", groups=4, max_tile_m=512):
    """FFN forward (emb=None). x: (..., nin). One fused pallas_call over the whole stack."""
    lead = x.shape[:-1]
    nin = x.shape[-1]
    xf = x.reshape(-1, nin)
    m = xf.shape[0]
    nhid = params["w0"].shape[1]
    nout = params["wy"].shape[1]
    nlayers = len(params["layers"])
    residual = (mlp_type == "resnet")
    if residual:
        for lp in params["layers"]:
            assert lp["w"].shape == (nhid, nhid), "residual path requires nhid -> nhid"

    tm = _pick_tile_m(m, max_tile_m)
    m_pad = _round_up(m, tm)
    if m_pad != m:
        xf = jnp.pad(xf, ((0, m_pad - m), (0, 0)))
    grid = (m_pad // tm,)

    # Group-mean projection P[c, c'] = 1/cg if same group else 0  (f32, tiny).
    cg = nhid // groups
    gid = np.arange(nhid) // cg
    p = jnp.asarray((gid[:, None] == gid[None, :]).astype(np.float32) / cg)

    args = [xf, params["w0"], params["b0"].reshape(1, nhid), p]
    in_specs = [
        pl.BlockSpec((tm, nin), lambda i: (i, 0)),
        pl.BlockSpec((nin, nhid), lambda i: (0, 0)),
        pl.BlockSpec((1, nhid), lambda i: (0, 0)),
        pl.BlockSpec((nhid, nhid), lambda i: (0, 0)),
    ]
    for lp in params["layers"]:
        args += [lp["gamma"].reshape(1, nhid), lp["beta"].reshape(1, nhid),
                 lp["w"], lp["b"].reshape(1, nhid)]
        in_specs += [pl.BlockSpec((1, nhid), lambda i: (0, 0)),
                     pl.BlockSpec((1, nhid), lambda i: (0, 0)),
                     pl.BlockSpec((nhid, nhid), lambda i: (0, 0)),
                     pl.BlockSpec((1, nhid), lambda i: (0, 0))]
    args += [params["wy"].T, params["by"].reshape(nout, 1)]
    in_specs += [pl.BlockSpec((nout, nhid), lambda i: (0, 0)),
                 pl.BlockSpec((nout, 1), lambda i: (0, 0))]

    kernel = functools.partial(_ffn_fused_kernel, nlayers=nlayers, residual=residual)

    flops = 2 * m_pad * (nin * nhid + nlayers * 3 * nhid * nhid + nhid * nout)
    transcendentals = m_pad * nhid * (2 * nlayers + 1)
    bytes_accessed = (xf.size * xf.dtype.itemsize
                      + m_pad * nout * x.dtype.itemsize
                      + sum(int(np.prod(a.shape)) * a.dtype.itemsize for a in args[1:]))

    out_t = pl.pallas_call(
        kernel,
        out_shape=jax.ShapeDtypeStruct((nout, m_pad), x.dtype),
        grid=grid,
        in_specs=in_specs,
        out_specs=pl.BlockSpec((nout, tm), lambda i: (0, i)),
        compiler_params=pltpu.CompilerParams(
            dimension_semantics=("parallel",),
            vmem_limit_bytes=32 * 1024 * 1024,
        ),
        cost_estimate=pl.CostEstimate(flops=flops, transcendentals=transcendentals,
                                      bytes_accessed=bytes_accessed),
    )(*args)

    out = out_t.T[:m]                     # back to (M, nout), drop row padding
    return out.reshape(*lead, nout)


# ------------------------------ params / reference -------------------------------
def init_ffn_params(key, nin, nhid, nout, nlayers):
    keys = jax.random.split(key, 3 * nlayers + 2)

    def lin(k, fan_in, fan_out):  # PyTorch nn.Linear default init
        kw, kb = jax.random.split(k)
        bound = 1.0 / np.sqrt(fan_in)
        w = jax.random.uniform(kw, (fan_in, fan_out), jnp.float32, -bound, bound)
        b = jax.random.uniform(kb, (fan_out,), jnp.float32, -bound, bound)
        return w, b

    w0, b0 = lin(keys[0], nin, nhid)
    layers = []
    for i in range(nlayers):
        w, b = lin(keys[1 + 3 * i], nhid, nhid)
        gamma = 1.0 + 0.1 * jax.random.normal(keys[2 + 3 * i], (nhid,), jnp.float32)
        beta = 0.1 * jax.random.normal(keys[3 + 3 * i], (nhid,), jnp.float32)
        layers.append({"w": w, "b": b, "gamma": gamma, "beta": beta})
    wy, by = lin(keys[-1], nhid, nout)
    return {"w0": w0, "b0": b0, "layers": layers, "wy": wy, "by": by}


def _silu(x):
    return x * jax.nn.sigmoid(x)


def _ref_groupnorm(x, gamma, beta, groups):
    M, c = x.shape
    xg = x.reshape(M, groups, c // groups)
    mu = xg.mean(-1, keepdims=True)
    v = xg.var(-1, keepdims=True)
    xn = ((xg - mu) / jnp.sqrt(v + EPS)).reshape(M, c)
    return xn * gamma + beta


def ref_forward(x, params, *, mlp_type="fc", groups=4):
    f32 = lambda a: jnp.asarray(a, jnp.float32)
    lead = x.shape[:-1]
    xf = f32(x).reshape(-1, x.shape[-1])
    h = xf @ f32(params["w0"]) + f32(params["b0"])
    for lp in params["layers"]:
        t = _silu(_ref_groupnorm(h, f32(lp["gamma"]), f32(lp["beta"]), groups)) \
            @ f32(lp["w"]) + f32(lp["b"])
        h = h + t if mlp_type == "resnet" else t
    out = _silu(h) @ f32(params["wy"]) + f32(params["by"])
    return out.reshape(*lead, -1)


if __name__ == "__main__":
    key = jax.random.PRNGKey(0)
    kx, kp = jax.random.split(key)

    # Small shapes: batch=4, seq=64 nodes, nin=32, nhid=64, nout=32, 2 hidden layers.
    B, S, nin, nhid, nout, nlayers, groups = 4, 64, 32, 64, 32, 2, 4
    x = jax.random.normal(kx, (B, S, nin), jnp.float32)
    params = init_ffn_params(kp, nin, nhid, nout, nlayers)

    # bf16 storage at the HBM boundary (halves DMA traffic); kernel math stays f32.
    STORE = jnp.bfloat16
    x_s = x.astype(STORE)
    params_s = jax.tree_util.tree_map(lambda a: a.astype(STORE), params)

    # mlp_type='fc' (module default)
    out_fc = jax.block_until_ready(ffn_forward(x_s, params_s, mlp_type="fc", groups=groups))
    assert out_fc.shape == (B, S, nout), out_fc.shape
    assert out_fc.dtype == STORE, out_fc.dtype
    ref_fc = ref_forward(x_s, params_s, mlp_type="fc", groups=groups)
    np.testing.assert_allclose(np.asarray(out_fc, np.float32), np.asarray(ref_fc),
                               atol=2.5e-2, rtol=2.5e-2)

    # mlp_type='resnet' (fused residual path)
    out_rn = jax.block_until_ready(ffn_forward(x_s, params_s, mlp_type="resnet", groups=groups))
    ref_rn = ref_forward(x_s, params_s, mlp_type="resnet", groups=groups)
    np.testing.assert_allclose(np.asarray(out_rn, np.float32), np.asarray(ref_rn),
                               atol=2.5e-2, rtol=2.5e-2)

    # Non-divisible row count (exercises padding + grid >= 2 path).
    x_odd = jax.random.normal(kx, (3, 50, nin), jnp.float32).astype(STORE)
    out_odd = jax.block_until_ready(ffn_forward(x_odd, params_s, mlp_type="fc", groups=groups))
    assert out_odd.shape == (3, 50, nout), out_odd.shape
    ref_odd = ref_forward(x_odd, params_s, mlp_type="fc", groups=groups)
    np.testing.assert_allclose(np.asarray(out_odd, np.float32), np.asarray(ref_odd),
                               atol=2.5e-2, rtol=2.5e-2)

    print("KERNEL_OK")
</pallas_src>

<mosaic_0001>
module attributes {stable_mosaic.version = 11 : i64} {
  func.func @_ffn_fused_kernel(%arg0: i32, %arg1: memref<128x32xbf16, #tpu.memory_space<vmem>>, %arg2: memref<32x64xbf16, #tpu.memory_space<vmem>>, %arg3: memref<1x64xbf16, #tpu.memory_space<vmem>>, %arg4: memref<64x64xf32, #tpu.memory_space<vmem>>, %arg5: memref<1x64xbf16, #tpu.memory_space<vmem>>, %arg6: memref<1x64xbf16, #tpu.memory_space<vmem>>, %arg7: memref<64x64xbf16, #tpu.memory_space<vmem>>, %arg8: memref<1x64xbf16, #tpu.memory_space<vmem>>, %arg9: memref<1x64xbf16, #tpu.memory_space<vmem>>, %arg10: memref<1x64xbf16, #tpu.memory_space<vmem>>, %arg11: memref<64x64xbf16, #tpu.memory_space<vmem>>, %arg12: memref<1x64xbf16, #tpu.memory_space<vmem>>, %arg13: memref<32x64xbf16, #tpu.memory_space<vmem>>, %arg14: memref<32x1xbf16, #tpu.memory_space<vmem>>, %arg15: memref<32x128xbf16, #tpu.memory_space<vmem>>) attributes {dimension_semantics = [#tpu.dimension_semantics<parallel>], iteration_bounds = array<i64: 2>, scalar_prefetch = 0 : i64, scratch_operands = 0 : i64, tpu.core_type = #tpu.core_type<tc>, window_params = [{transform_indices = @transform_0, window_bounds = array<i64: 128, 32>}, {pipeline_mode = #tpu.pipeline_mode<synchronous>, transform_indices = @transform_1, window_bounds = array<i64: 32, 64>}, {pipeline_mode = #tpu.pipeline_mode<synchronous>, transform_indices = @transform_2, window_bounds = array<i64: 1, 64>}, {pipeline_mode = #tpu.pipeline_mode<synchronous>, transform_indices = @transform_3, window_bounds = array<i64: 64, 64>}, {pipeline_mode = #tpu.pipeline_mode<synchronous>, transform_indices = @transform_4, window_bounds = array<i64: 1, 64>}, {pipeline_mode = #tpu.pipeline_mode<synchronous>, transform_indices = @transform_5, window_bounds = array<i64: 1, 64>}, {pipeline_mode = #tpu.pipeline_mode<synchronous>, transform_indices = @transform_6, window_bounds = array<i64: 64, 64>}, {pipeline_mode = #tpu.pipeline_mode<synchronous>, transform_indices = @transform_7, window_bounds = array<i64: 1, 64>}, {pipeline_mode = #tpu.pipeline_mode<synchronous>, transform_indices = @transform_8, window_bounds = array<i64: 1, 64>}, {pipeline_mode = #tpu.pipeline_mode<synchronous>, transform_indices = @transform_9, window_bounds = array<i64: 1, 64>}, {pipeline_mode = #tpu.pipeline_mode<synchronous>, transform_indices = @transform_10, window_bounds = array<i64: 64, 64>}, {pipeline_mode = #tpu.pipeline_mode<synchronous>, transform_indices = @transform_11, window_bounds = array<i64: 1, 64>}, {pipeline_mode = #tpu.pipeline_mode<synchronous>, transform_indices = @transform_12, window_bounds = array<i64: 32, 64>}, {pipeline_mode = #tpu.pipeline_mode<synchronous>, transform_indices = @transform_13, window_bounds = array<i64: 32, 1>}, {transform_indices = @transform_14, window_bounds = array<i64: 32, 128>}]} {
    %c0 = arith.constant 0 : index
    %c0_0 = arith.constant 0 : index
    %0 = vector.load %arg1[%c0, %c0_0] : memref<128x32xbf16, #tpu.memory_space<vmem>>, vector<128x32xbf16>
    %1 = arith.extf %0 : vector<128x32xbf16> to vector<128x32xf32>
    %c0_1 = arith.constant 0 : index
    %c0_2 = arith.constant 0 : index
    %2 = vector.load %arg2[%c0_1, %c0_2] : memref<32x64xbf16, #tpu.memory_space<vmem>>, vector<32x64xbf16>
    %3 = arith.extf %2 : vector<32x64xbf16> to vector<32x64xf32>
    %cst = arith.constant dense<0.000000e+00> : vector<128x64xf32>
    %4 = tpu.matmul %1, %3, %cst {dimension_numbers = #tpu.dot_dimension_numbers<[1], [0], [0], [1], [0, 0, 1, 1], [], []>} : vector<128x32xf32>, vector<32x64xf32>, vector<128x64xf32> -> vector<128x64xf32>
    %c0_3 = arith.constant 0 : index
    %c0_4 = arith.constant 0 : index
    %5 = vector.load %arg3[%c0_3, %c0_4] : memref<1x64xbf16, #tpu.memory_space<vmem>>, vector<1x64xbf16>
    %6 = arith.extf %5 : vector<1x64xbf16> to vector<1x64xf32>
    %7 = vector.broadcast %6 : vector<1x64xf32> to vector<128x64xf32>
    %8 = arith.addf %4, %7 : vector<128x64xf32>
    %c0_5 = arith.constant 0 : index
    %c0_6 = arith.constant 0 : index
    %9 = vector.load %arg4[%c0_5, %c0_6] : memref<64x64xf32, #tpu.memory_space<vmem>>, vector<64x64xf32>
    %c0_7 = arith.constant 0 : index
    %c0_8 = arith.constant 0 : index
    %10 = vector.load %arg5[%c0_7, %c0_8] : memref<1x64xbf16, #tpu.memory_space<vmem>>, vector<1x64xbf16>
    %11 = arith.extf %10 : vector<1x64xbf16> to vector<1x64xf32>
    %c0_9 = arith.constant 0 : index
    %c0_10 = arith.constant 0 : index
    %12 = vector.load %arg6[%c0_9, %c0_10] : memref<1x64xbf16, #tpu.memory_space<vmem>>, vector<1x64xbf16>
    %13 = arith.extf %12 : vector<1x64xbf16> to vector<1x64xf32>
    %c0_11 = arith.constant 0 : index
    %c0_12 = arith.constant 0 : index
    %14 = vector.load %arg7[%c0_11, %c0_12] : memref<64x64xbf16, #tpu.memory_space<vmem>>, vector<64x64xbf16>
    %15 = arith.extf %14 : vector<64x64xbf16> to vector<64x64xf32>
    %c0_13 = arith.constant 0 : index
    %c0_14 = arith.constant 0 : index
    %16 = vector.load %arg8[%c0_13, %c0_14] : memref<1x64xbf16, #tpu.memory_space<vmem>>, vector<1x64xbf16>
    %17 = arith.extf %16 : vector<1x64xbf16> to vector<1x64xf32>
    %cst_15 = arith.constant dense<0.000000e+00> : vector<128x64xf32>
    %18 = tpu.matmul %8, %9, %cst_15 {dimension_numbers = #tpu.dot_dimension_numbers<[1], [0], [0], [1], [0, 0, 1, 1], [], []>} : vector<128x64xf32>, vector<64x64xf32>, vector<128x64xf32> -> vector<128x64xf32>
    %19 = arith.subf %8, %18 : vector<128x64xf32>
    %20 = arith.mulf %19, %19 : vector<128x64xf32>
    %cst_16 = arith.constant dense<0.000000e+00> : vector<128x64xf32>
    %21 = tpu.matmul %20, %9, %cst_16 {dimension_numbers = #tpu.dot_dimension_numbers<[1], [0], [0], [1], [0, 0, 1, 1], [], []>} : vector<128x64xf32>, vector<64x64xf32>, vector<128x64xf32> -> vector<128x64xf32>
    %cst_17 = arith.constant 9.99999974E-6 : f32
    %22 = vector.broadcast %cst_17 : f32 to vector<128x64xf32>
    %23 = arith.addf %21, %22 : vector<128x64xf32>
    %24 = math.rsqrt %23 : vector<128x64xf32>
    %25 = arith.mulf %19, %24 : vector<128x64xf32>
    %26 = vector.broadcast %11 : vector<1x64xf32> to vector<128x64xf32>
    %27 = arith.mulf %25, %26 : vector<128x64xf32>
    %28 = vector.broadcast %13 : vector<1x64xf32> to vector<128x64xf32>
    %29 = arith.addf %27, %28 : vector<128x64xf32>
    %30 = arith.negf %29 : vector<128x64xf32>
    %31 = math.exp %30 : vector<128x64xf32>
    %cst_18 = arith.constant 1.000000e+00 : f32
    %32 = vector.broadcast %cst_18 : f32 to vector<128x64xf32>
    %33 = arith.addf %32, %31 : vector<128x64xf32>
    %34 = arith.divf %32, %33 : vector<128x64xf32>
    %35 = arith.mulf %29, %34 : vector<128x64xf32>
    %cst_19 = arith.constant dense<0.000000e+00> : vector<128x64xf32>
    %36 = tpu.matmul %35, %15, %cst_19 {dimension_numbers = #tpu.dot_dimension_numbers<[1], [0], [0], [1], [0, 0, 1, 1], [], []>} : vector<128x64xf32>, vector<64x64xf32>, vector<128x64xf32> -> vector<128x64xf32>
    %37 = vector.broadcast %17 : vector<1x64xf32> to vector<128x64xf32>
    %38 = arith.addf %36, %37 : vector<128x64xf32>
    %c0_20 = arith.constant 0 : index
    %c0_21 = arith.constant 0 : index
    %39 = vector.load %arg9[%c0_20, %c0_21] : memref<1x64xbf16, #tpu.memory_space<vmem>>, vector<1x64xbf16>
    %40 = arith.extf %39 : vector<1x64xbf16> to vector<1x64xf32>
    %c0_22 = arith.constant 0 : index
    %c0_23 = arith.constant 0 : index
    %41 = vector.load %arg10[%c0_22, %c0_23] : memref<1x64xbf16, #tpu.memory_space<vmem>>, vector<1x64xbf16>
    %42 = arith.extf %41 : vector<1x64xbf16> to vector<1x64xf32>
    %c0_24 = arith.constant 0 : index
    %c0_25 = arith.constant 0 : index
    %43 = vector.load %arg11[%c0_24, %c0_25] : memref<64x64xbf16, #tpu.memory_space<vmem>>, vector<64x64xbf16>
    %44 = arith.extf %43 : vector<64x64xbf16> to vector<64x64xf32>
    %c0_26 = arith.constant 0 : index
    %c0_27 = arith.constant 0 : index
    %45 = vector.load %arg12[%c0_26, %c0_27] : memref<1x64xbf16, #tpu.memory_space<vmem>>, vector<1x64xbf16>
    %46 = arith.extf %45 : vector<1x64xbf16> to vector<1x64xf32>
    %cst_28 = arith.constant dense<0.000000e+00> : vector<128x64xf32>
    %47 = tpu.matmul %38, %9, %cst_28 {dimension_numbers = #tpu.dot_dimension_numbers<[1], [0], [0], [1], [0, 0, 1, 1], [], []>} : vector<128x64xf32>, vector<64x64xf32>, vector<128x64xf32> -> vector<128x64xf32>
    %48 = arith.subf %38, %47 : vector<128x64xf32>
    %49 = arith.mulf %48, %48 : vector<128x64xf32>
    %cst_29 = arith.constant dense<0.000000e+00> : vector<128x64xf32>
    %50 = tpu.matmul %49, %9, %cst_29 {dimension_numbers = #tpu.dot_dimension_numbers<[1], [0], [0], [1], [0, 0, 1, 1], [], []>} : vector<128x64xf32>, vector<64x64xf32>, vector<128x64xf32> -> vector<128x64xf32>
    %cst_30 = arith.constant 9.99999974E-6 : f32
    %51 = vector.broadcast %cst_30 : f32 to vector<128x64xf32>
    %52 = arith.addf %50, %51 : vector<128x64xf32>
    %53 = math.rsqrt %52 : vector<128x64xf32>
    %54 = arith.mulf %48, %53 : vector<128x64xf32>
    %55 = vector.broadcast %40 : vector<1x64xf32> to vector<128x64xf32>
    %56 = arith.mulf %54, %55 : vector<128x64xf32>
    %57 = vector.broadcast %42 : vector<1x64xf32> to vector<128x64xf32>
    %58 = arith.addf %56, %57 : vector<128x64xf32>
    %59 = arith.negf %58 : vector<128x64xf32>
    %60 = math.exp %59 : vector<128x64xf32>
    %cst_31 = arith.constant 1.000000e+00 : f32
    %61 = vector.broadcast %cst_31 : f32 to vector<128x64xf32>
    %62 = arith.addf %61, %60 : vector<128x64xf32>
    %63 = arith.divf %61, %62 : vector<128x64xf32>
    %64 = arith.mulf %58, %63 : vector<128x64xf32>
    %cst_32 = arith.constant dense<0.000000e+00> : vector<128x64xf32>
    %65 = tpu.matmul %64, %44, %cst_32 {dimension_numbers = #tpu.dot_dimension_numbers<[1], [0], [0], [1], [0, 0, 1, 1], [], []>} : vector<128x64xf32>, vector<64x64xf32>, vector<128x64xf32> -> vector<128x64xf32>
    %66 = vector.broadcast %46 : vector<1x64xf32> to vector<128x64xf32>
    %67 = arith.addf %65, %66 : vector<128x64xf32>
    %68 = arith.negf %67 : vector<128x64xf32>
    %69 = math.exp %68 : vector<128x64xf32>
    %cst_33 = arith.constant 1.000000e+00 : f32
    %70 = vector.broadcast %cst_33 : f32 to vector<128x64xf32>
    %71 = arith.addf %70, %69 : vector<128x64xf32>
    %72 = arith.divf %70, %71 : vector<128x64xf32>
    %73 = arith.mulf %67, %72 : vector<128x64xf32>
    %c0_34 = arith.constant 0 : index
    %c0_35 = arith.constant 0 : index
    %74 = vector.load %arg13[%c0_34, %c0_35] : memref<32x64xbf16, #tpu.memory_space<vmem>>, vector<32x64xbf16>
    %75 = arith.extf %74 : vector<32x64xbf16> to vector<32x64xf32>
    %cst_36 = arith.constant dense<0.000000e+00> : vector<32x128xf32>
    %76 = tpu.matmul %75, %73, %cst_36 {dimension_numbers = #tpu.dot_dimension_numbers<[1], [1], [0], [0], [0, 0, 1, 0], [], []>} : vector<32x64xf32>, vector<128x64xf32>, vector<32x128xf32> -> vector<32x128xf32>
    %c0_37 = arith.constant 0 : index
    %c0_38 = arith.constant 0 : index
    %77 = vector.load %arg14[%c0_37, %c0_38] : memref<32x1xbf16, #tpu.memory_space<vmem>>, vector<32x1xbf16>
    %78 = arith.extf %77 : vector<32x1xbf16> to vector<32x1xf32>
    %79 = vector.broadcast %78 : vector<32x1xf32> to vector<32x128xf32>
    %80 = arith.addf %76, %79 : vector<32x128xf32>
    %81 = arith.truncf %80 : vector<32x128xf32> to vector<32x128xbf16>
    %c0_39 = arith.constant 0 : index
    %c0_40 = arith.constant 0 : index
    %82 = vector.load %arg15[%c0_39, %c0_40] : memref<32x128xbf16, #tpu.memory_space<vmem>>, vector<32x128xbf16>
    tpu.vector_store %arg15[%c0_39, %c0_40], %81 {strides = array<i32>} : memref<32x128xbf16, #tpu.memory_space<vmem>>, vector<32x128xbf16>,
    return
  }
  func.func @transform_0(%arg0: i32) -> (i32, i32) {
    %c0_i32 = arith.constant 0 : i32
    %c0_i32_0 = arith.constant 0 : i32
    return %arg0, %c0_i32 : i32, i32
  }
  func.func @transform_1(%arg0: i32) -> (i32, i32) {
    %c0_i32 = arith.constant 0 : i32
    %c0_i32_0 = arith.constant 0 : i32
    %c0_i32_1 = arith.constant 0 : i32
    return %c0_i32, %c0_i32_0 : i32, i32
  }
  func.func @transform_2(%arg0: i32) -> (i32, i32) {
    %c0_i32 = arith.constant 0 : i32
    %c0_i32_0 = arith.constant 0 : i32
    %c0_i32_1 = arith.constant 0 : i32
    return %c0_i32, %c0_i32_0 : i32, i32
  }
  func.func @transform_3(%arg0: i32) -> (i32, i32) {
    %c0_i32 = arith.constant 0 : i32
    %c0_i32_0 = arith.constant 0 : i32
    %c0_i32_1 = arith.constant 0 : i32
    return %c0_i32, %c0_i32_0 : i32, i32
  }
  func.func @transform_4(%arg0: i32) -> (i32, i32) {
    %c0_i32 = arith.constant 0 : i32
    %c0_i32_0 = arith.constant 0 : i32
    %c0_i32_1 = arith.constant 0 : i32
    return %c0_i32, %c0_i32_0 : i32, i32
  }
  func.func @transform_5(%arg0: i32) -> (i32, i32) {
    %c0_i32 = arith.constant 0 : i32
    %c0_i32_0 = arith.constant 0 : i32
    %c0_i32_1 = arith.constant 0 : i32
    return %c0_i32, %c0_i32_0 : i32, i32
  }
  func.func @transform_6(%arg0: i32) -> (i32, i32) {
    %c0_i32 = arith.constant 0 : i32
    %c0_i32_0 = arith.constant 0 : i32
    %c0_i32_1 = arith.constant 0 : i32
    return %c0_i32, %c0_i32_0 : i32, i32
  }
  func.func @transform_7(%arg0: i32) -> (i32, i32) {
    %c0_i32 = arith.constant 0 : i32
    %c0_i32_0 = arith.constant 0 : i32
    %c0_i32_1 = arith.constant 0 : i32
    return %c0_i32, %c0_i32_0 : i32, i32
  }
  func.func @transform_8(%arg0: i32) -> (i32, i32) {
    %c0_i32 = arith.constant 0 : i32
    %c0_i32_0 = arith.constant 0 : i32
    %c0_i32_1 = arith.constant 0 : i32
    return %c0_i32, %c0_i32_0 : i32, i32
  }
  func.func @transform_9(%arg0: i32) -> (i32, i32) {
    %c0_i32 = arith.constant 0 : i32
    %c0_i32_0 = arith.constant 0 : i32
    %c0_i32_1 = arith.constant 0 : i32
    return %c0_i32, %c0_i32_0 : i32, i32
  }
  func.func @transform_10(%arg0: i32) -> (i32, i32) {
    %c0_i32 = arith.constant 0 : i32
    %c0_i32_0 = arith.constant 0 : i32
    %c0_i32_1 = arith.constant 0 : i32
    return %c0_i32, %c0_i32_0 : i32, i32
  }
  func.func @transform_11(%arg0: i32) -> (i32, i32) {
    %c0_i32 = arith.constant 0 : i32
    %c0_i32_0 = arith.constant 0 : i32
    %c0_i32_1 = arith.constant 0 : i32
    return %c0_i32, %c0_i32_0 : i32, i32
  }
  func.func @transform_12(%arg0: i32) -> (i32, i32) {
    %c0_i32 = arith.constant 0 : i32
    %c0_i32_0 = arith.constant 0 : i32
    %c0_i32_1 = arith.constant 0 : i32
    return %c0_i32, %c0_i32_0 : i32, i32
  }
  func.func @transform_13(%arg0: i32) -> (i32, i32) {
    %c0_i32 = arith.constant 0 : i32
    %c0_i32_0 = arith.constant 0 : i32
    %c0_i32_1 = arith.constant 0 : i32
    return %c0_i32, %c0_i32_0 : i32, i32
  }
  func.func @transform_14(%arg0: i32) -> (i32, i32) {
    %c0_i32 = arith.constant 0 : i32
    %c0_i32_0 = arith.constant 0 : i32
    return %c0_i32, %arg0 : i32, i32
  }
}

</mosaic_0001>

<llo_original>
// kernel: tpu_custom_call.1
$region0: #{tpu_custom_call.1}
  #allocation0 [shape = 'u32[]', space=smem, size = 0x4, offset = 0x4, fixed_abs, tag = 'smem constant byte address 0x4 - core index']
  #allocation1 [shape = 'u32[144,128]{1,0:T(1,128)}', space=vmem, size = 0x12000, scoped, tag = 'internal scratch']
  %s0 = inlined_call_operand.vmem [shape: bf16[256,32], index: 0, kind: input, shape index: {}]
  %s1 = inlined_call_operand.vmem [shape: bf16[32,64], index: 1, kind: input, shape index: {}]
  %s2 = inlined_call_operand.vmem [shape: bf16[1,64], index: 2, kind: input, shape index: {}]
  %s3 = inlined_call_operand.vmem [shape: f32[64,64], index: 3, kind: input, shape index: {}]
  %s4 = inlined_call_operand.vmem [shape: bf16[1,64], index: 4, kind: input, shape index: {}]
  %s5 = inlined_call_operand.vmem [shape: bf16[1,64], index: 5, kind: input, shape index: {}]
  %s6 = inlined_call_operand.vmem [shape: bf16[64,64], index: 6, kind: input, shape index: {}]
  %s7 = inlined_call_operand.vmem [shape: bf16[1,64], index: 7, kind: input, shape index: {}]
  %s8 = inlined_call_operand.vmem [shape: bf16[1,64], index: 8, kind: input, shape index: {}]
  %s9 = inlined_call_operand.vmem [shape: bf16[1,64], index: 9, kind: input, shape index: {}]
  %s10 = inlined_call_operand.vmem [shape: bf16[64,64], index: 10, kind: input, shape index: {}]
  %s11 = inlined_call_operand.vmem [shape: bf16[1,64], index: 11, kind: input, shape index: {}]
  %s12 = inlined_call_operand.vmem [shape: bf16[32,64], index: 12, kind: input, shape index: {}]
  %s13 = inlined_call_operand.vmem [shape: bf16[32,1], index: 13, kind: input, shape index: {}]
  %s14 = inlined_call_operand.hbm [shape: bf16[32,256], index: 14, kind: output, shape index: {}]
  %s15 = sld [smem:[#allocation0]]
  $region89: #{tpu_custom_call.1} parent=0
    _
  %s17 = ssub.s32 1, %s15
  %s18 = scalar_select 0, %s17, %s15
  $region1: #{tpu_custom_call.1} parent=0
    #allocation2 [shape = 'u8[16384]{0}', space=vmem, size = 0x4000, scoped, tag = 'output window, operand 0']
    #allocation3 [shape = 's32[2]{0}', space=sflag, size = 0x8, scoped, tag = 'scoped memory for tpu_custom_call.1']
    %19 = vsyncpa [#allocation3], 0
    %s20 = scalar_lea.sflag [#allocation3], 1
    %21 = vsyncpa %s20, 0
    loop: start=0, step=1, limit=4
    $region2: #{tpu_custom_call.1} parent=1 // loop_pre_header
      _
    $region3: #{tpu_custom_call.1} parent=1 // loop_header
      %s23 = sphi 0, %s27
      %p24 = scmp.ge.s32.totalorder %s23, 4
      %s33 = sphi 0, %s35
      %s36 = sphi 0, %s33
      %s37 = sphi 0, %s36
      %s53 = sphi 0, %s37
      %s57 = sphi 0, %s57
      %s59 = sphi 0, %s57
      %s60 = sphi 0, %s59
      %s74 = sphi 0, %s60
      %s78 = sphi 0, %s78
      %s80 = sphi 0, %s78
      %s81 = sphi 0, %s80
      %s95 = sphi 0, %s81
      %s99 = sphi 0, %s99
      %s101 = sphi 0, %s99
      %s102 = sphi 0, %s101
      %s116 = sphi 0, %s102
      %s120 = sphi 0, %s120
      %s122 = sphi 0, %s120
      %s123 = sphi 0, %s122
      %s137 = sphi 0, %s123
      %s141 = sphi 0, %s141
      %s143 = sphi 0, %s141
      %s144 = sphi 0, %s143
      %s158 = sphi 0, %s144
      %s162 = sphi 0, %s162
      %s164 = sphi 0, %s162
      %s165 = sphi 0, %s164
      %s179 = sphi 0, %s165
      %s183 = sphi 0, %s183
      %s185 = sphi 0, %s183
      %s186 = sphi 0, %s185
      %s200 = sphi 0, %s186
      %s204 = sphi 0, %s204
      %s206 = sphi 0, %s204
      %s207 = sphi 0, %s206
      %s221 = sphi 0, %s207
      %s225 = sphi 0, %s225
      %s227 = sphi 0, %s225
      %s228 = sphi 0, %s227
      %s242 = sphi 0, %s228
      %s246 = sphi 0, %s246
      %s248 = sphi 0, %s246
      %s249 = sphi 0, %s248
      %s263 = sphi 0, %s249
      %s267 = sphi 0, %s267
      %s269 = sphi 0, %s267
      %s270 = sphi 0, %s269
      %s284 = sphi 0, %s270
      %s288 = sphi 0, %s288
      %s290 = sphi 0, %s288
      %s291 = sphi 0, %s290
      %s305 = sphi 0, %s291
      %s309 = sphi 0, %s309
      %s311 = sphi 0, %s309
      %s312 = sphi 0, %s311
      %s326 = sphi 0, %s312
      %s332 = sphi 0, %s334
      %s335 = sphi 0, %s332
      %s336 = sphi 0, %s335
      %s352 = sphi 0, %s336
    $region4: #{tpu_custom_call.1} parent=1 // loop_header_branch
      %26 = sbr.rel (%p24) target = $region8
    $region5: #{tpu_custom_call.1} parent=1 // loop_body
      %s28 = ssub.s32 %s23, 1
      %s29 = ssub.s32 %s23, 2
      %s30 = sadd.s32 %s23, 1
      %s31 = ssub.s32 %s23, %s30
      %p32 = scmp.eq.s32.totalorder %s31, 0
      %s34 = sadd.s32 %s33, 1
      %s35 = scalar_select %p32, %s33, %s34
      %p38 = pneg %p32
      %p39 = scmp.eq.s32.totalorder %s23, 1
      %p40 = por %p38, %p39
      %p41 = scmp.ne.s32.totalorder %s33, %s36
      %p42 = scmp.eq.s32.totalorder %s23, 0
      %p43 = por %p41, %p42
      %p44 = scmp.ne.s32.totalorder %s33, %s36
      %p45 = scmp.eq.s32.totalorder %s28, 1
      %p46 = por %p44, %p45
      %p47 = scmp.ne.s32.totalorder %s36, %s37
      %p48 = scmp.eq.s32.totalorder %s28, 0
      %p49 = por %p47, %p48
      %p50 = scmp.ne.s32.totalorder %s36, %s37
      %p51 = scmp.eq.s32.totalorder %s29, 1
      %p52 = por %p50, %p51
      %p54 = scmp.ne.s32.totalorder %s37, %s53
      %p55 = scmp.eq.s32.totalorder %s29, 0
      %p56 = por %p54, %p55
      %s58 = sadd.s32 %s57, 1
      %p61 = scmp.eq.s32.totalorder %s23, 1
      %p62 = scmp.ne.s32.totalorder %s57, %s59
      %p63 = scmp.eq.s32.totalorder %s23, 0
      %p64 = por %p62, %p63
      %p65 = scmp.ne.s32.totalorder %s57, %s59
      %p66 = scmp.eq.s32.totalorder %s28, 1
      %p67 = por %p65, %p66
      %p68 = scmp.ne.s32.totalorder %s59, %s60
      %p69 = scmp.eq.s32.totalorder %s28, 0
      %p70 = por %p68, %p69
      %p71 = scmp.ne.s32.totalorder %s59, %s60
      %p72 = scmp.eq.s32.totalorder %s29, 1
      %p73 = por %p71, %p72
      %p75 = scmp.ne.s32.totalorder %s60, %s74
      %p76 = scmp.eq.s32.totalorder %s29, 0
      %p77 = por %p75, %p76
      %s79 = sadd.s32 %s78, 1
      %p82 = scmp.eq.s32.totalorder %s23, 1
      %p83 = scmp.ne.s32.totalorder %s78, %s80
      %p84 = scmp.eq.s32.totalorder %s23, 0
      %p85 = por %p83, %p84
      %p86 = scmp.ne.s32.totalorder %s78, %s80
      %p87 = scmp.eq.s32.totalorder %s28, 1
      %p88 = por %p86, %p87
      %p89 = scmp.ne.s32.totalorder %s80, %s81
      %p90 = scmp.eq.s32.totalorder %s28, 0
      %p91 = por %p89, %p90
      %p92 = scmp.ne.s32.totalorder %s80, %s81
      %p93 = scmp.eq.s32.totalorder %s29, 1
      %p94 = por %p92, %p93
      %p96 = scmp.ne.s32.totalorder %s81, %s95
      %p97 = scmp.eq.s32.totalorder %s29, 0
      %p98 = por %p96, %p97
      %s100 = sadd.s32 %s99, 1
      %p103 = scmp.eq.s32.totalorder %s23, 1
      %p104 = scmp.ne.s32.totalorder %s99, %s101
      %p105 = scmp.eq.s32.totalorder %s23, 0
      %p106 = por %p104, %p105
      %p107 = scmp.ne.s32.totalorder %s99, %s101
      %p108 = scmp.eq.s32.totalorder %s28, 1
      %p109 = por %p107, %p108
      %p110 = scmp.ne.s32.totalorder %s101, %s102
      %p111 = scmp.eq.s32.totalorder %s28, 0
      %p112 = por %p110, %p111
      %p113 = scmp.ne.s32.totalorder %s101, %s102
      %p114 = scmp.eq.s32.totalorder %s29, 1
      %p115 = por %p113, %p114
      %p117 = scmp.ne.s32.totalorder %s102, %s116
      %p118 = scmp.eq.s32.totalorder %s29, 0
      %p119 = por %p117, %p118
      %s121 = sadd.s32 %s120, 1
      %p124 = scmp.eq.s32.totalorder %s23, 1
      %p125 = scmp.ne.s32.totalorder %s120, %s122
      %p126 = scmp.eq.s32.totalorder %s23, 0
      %p127 = por %p125, %p126
      %p128 = scmp.ne.s32.totalorder %s120, %s122
      %p129 = scmp.eq.s32.totalorder %s28, 1
      %p130 = por %p128, %p129
      %p131 = scmp.ne.s32.totalorder %s122, %s123
      %p132 = scmp.eq.s32.totalorder %s28, 0
      %p133 = por %p131, %p132
      %p134 = scmp.ne.s32.totalorder %s122, %s123
      %p135 = scmp.eq.s32.totalorder %s29, 1
      %p136 = por %p134, %p135
      %p138 = scmp.ne.s32.totalorder %s123, %s137
      %p139 = scmp.eq.s32.totalorder %s29, 0
      %p140 = por %p138, %p139
      %s142 = sadd.s32 %s141, 1
      %p145 = scmp.eq.s32.totalorder %s23, 1
      %p146 = scmp.ne.s32.totalorder %s141, %s143
      %p147 = scmp.eq.s32.totalorder %s23, 0
      %p148 = por %p146, %p147
      %p149 = scmp.ne.s32.totalorder %s141, %s143
      %p150 = scmp.eq.s32.totalorder %s28, 1
      %p151 = por %p149, %p150
      %p152 = scmp.ne.s32.totalorder %s143, %s144
      %p153 = scmp.eq.s32.totalorder %s28, 0
      %p154 = por %p152, %p153
      %p155 = scmp.ne.s32.totalorder %s143, %s144
      %p156 = scmp.eq.s32.totalorder %s29, 1
      %p157 = por %p155, %p156
      %p159 = scmp.ne.s32.totalorder %s144, %s158
      %p160 = scmp.eq.s32.totalorder %s29, 0
      %p161 = por %p159, %p160
      %s163 = sadd.s32 %s162, 1
      %p166 = scmp.eq.s32.totalorder %s23, 1
      %p167 = scmp.ne.s32.totalorder %s162, %s164
      %p168 = scmp.eq.s32.totalorder %s23, 0
      %p169 = por %p167, %p168
      %p170 = scmp.ne.s32.totalorder %s162, %s164
      %p171 = scmp.eq.s32.totalorder %s28, 1
      %p172 = por %p170, %p171
      %p173 = scmp.ne.s32.totalorder %s164, %s165
      %p174 = scmp.eq.s32.totalorder %s28, 0
      %p175 = por %p173, %p174
      %p176 = scmp.ne.s32.totalorder %s164, %s165
      %p177 = scmp.eq.s32.totalorder %s29, 1
      %p178 = por %p176, %p177
      %p180 = scmp.ne.s32.totalorder %s165, %s179
      %p181 = scmp.eq.s32.totalorder %s29, 0
      %p182 = por %p180, %p181
      %s184 = sadd.s32 %s183, 1
      %p187 = scmp.eq.s32.totalorder %s23, 1
      %p188 = scmp.ne.s32.totalorder %s183, %s185
      %p189 = scmp.eq.s32.totalorder %s23, 0
      %p190 = por %p188, %p189
      %p191 = scmp.ne.s32.totalorder %s183, %s185
      %p192 = scmp.eq.s32.totalorder %s28, 1
      %p193 = por %p191, %p192
      %p194 = scmp.ne.s32.totalorder %s185, %s186
      %p195 = scmp.eq.s32.totalorder %s28, 0
      %p196 = por %p194, %p195
      %p197 = scmp.ne.s32.totalorder %s185, %s186
      %p198 = scmp.eq.s32.totalorder %s29, 1
      %p199 = por %p197, %p198
      %p201 = scmp.ne.s32.totalorder %s186, %s200
      %p202 = scmp.eq.s32.totalorder %s29, 0
      %p203 = por %p201, %p202
      %s205 = sadd.s32 %s204, 1
      %p208 = scmp.eq.s32.totalorder %s23, 1
      %p209 = scmp.ne.s32.totalorder %s204, %s206
      %p210 = scmp.eq.s32.totalorder %s23, 0
      %p211 = por %p209, %p210
      %p212 = scmp.ne.s32.totalorder %s204, %s206
      %p213 = scmp.eq.s32.totalorder %s28, 1
      %p214 = por %p212, %p213
      %p215 = scmp.ne.s32.totalorder %s206, %s207
      %p216 = scmp.eq.s32.totalorder %s28, 0
      %p217 = por %p215, %p216
      %p218 = scmp.ne.s32.totalorder %s206, %s207
      %p219 = scmp.eq.s32.totalorder %s29, 1
      %p220 = por %p218, %p219
      %p222 = scmp.ne.s32.totalorder %s207, %s221
      %p223 = scmp.eq.s32.totalorder %s29, 0
      %p224 = por %p222, %p223
      %s226 = sadd.s32 %s225, 1
      %p229 = scmp.eq.s32.totalorder %s23, 1
      %p230 = scmp.ne.s32.totalorder %s225, %s227
      %p231 = scmp.eq.s32.totalorder %s23, 0
      %p232 = por %p230, %p231
      %p233 = scmp.ne.s32.totalorder %s225, %s227
      %p234 = scmp.eq.s32.totalorder %s28, 1
      %p235 = por %p233, %p234
      %p236 = scmp.ne.s32.totalorder %s227, %s228
      %p237 = scmp.eq.s32.totalorder %s28, 0
      %p238 = por %p236, %p237
      %p239 = scmp.ne.s32.totalorder %s227, %s228
      %p240 = scmp.eq.s32.totalorder %s29, 1
      %p241 = por %p239, %p240
      %p243 = scmp.ne.s32.totalorder %s228, %s242
      %p244 = scmp.eq.s32.totalorder %s29, 0
      %p245 = por %p243, %p244
      %s247 = sadd.s32 %s246, 1
      %p250 = scmp.eq.s32.totalorder %s23, 1
      %p251 = scmp.ne.s32.totalorder %s246, %s248
      %p252 = scmp.eq.s32.totalorder %s23, 0
      %p253 = por %p251, %p252
      %p254 = scmp.ne.s32.totalorder %s246, %s248
      %p255 = scmp.eq.s32.totalorder %s28, 1
      %p256 = por %p254, %p255
      %p257 = scmp.ne.s32.totalorder %s248, %s249
      %p258 = scmp.eq.s32.totalorder %s28, 0
      %p259 = por %p257, %p258
      %p260 = scmp.ne.s32.totalorder %s248, %s249
      %p261 = scmp.eq.s32.totalorder %s29, 1
      %p262 = por %p260, %p261
      %p264 = scmp.ne.s32.totalorder %s249, %s263
      %p265 = scmp.eq.s32.totalorder %s29, 0
      %p266 = por %p264, %p265
      %s268 = sadd.s32 %s267, 1
      %p271 = scmp.eq.s32.totalorder %s23, 1
      %p272 = scmp.ne.s32.totalorder %s267, %s269
      %p273 = scmp.eq.s32.totalorder %s23, 0
      %p274 = por %p272, %p273
      %p275 = scmp.ne.s32.totalorder %s267, %s269
      %p276 = scmp.eq.s32.totalorder %s28, 1
      %p277 = por %p275, %p276
      %p278 = scmp.ne.s32.totalorder %s269, %s270
      %p279 = scmp.eq.s32.totalorder %s28, 0
      %p280 = por %p278, %p279
      %p281 = scmp.ne.s32.totalorder %s269, %s270
      %p282 = scmp.eq.s32.totalorder %s29, 1
      %p283 = por %p281, %p282
      %p285 = scmp.ne.s32.totalorder %s270, %s284
      %p286 = scmp.eq.s32.totalorder %s29, 0
      %p287 = por %p285, %p286
      %s289 = sadd.s32 %s288, 1
      %p292 = scmp.eq.s32.totalorder %s23, 1
      %p293 = scmp.ne.s32.totalorder %s288, %s290
      %p294 = scmp.eq.s32.totalorder %s23, 0
      %p295 = por %p293, %p294
      %p296 = scmp.ne.s32.totalorder %s288, %s290
      %p297 = scmp.eq.s32.totalorder %s28, 1
      %p298 = por %p296, %p297
      %p299 = scmp.ne.s32.totalorder %s290, %s291
      %p300 = scmp.eq.s32.totalorder %s28, 0
      %p301 = por %p299, %p300
      %p302 = scmp.ne.s32.totalorder %s290, %s291
      %p303 = scmp.eq.s32.totalorder %s29, 1
      %p304 = por %p302, %p303
      %p306 = scmp.ne.s32.totalorder %s291, %s305
      %p307 = scmp.eq.s32.totalorder %s29, 0
      %p308 = por %p306, %p307
      %s310 = sadd.s32 %s309, 1
      %p313 = scmp.eq.s32.totalorder %s23, 1
      %p314 = scmp.ne.s32.totalorder %s309, %s311
      %p315 = scmp.eq.s32.totalorder %s23, 0
      %p316 = por %p314, %p315
      %p317 = scmp.ne.s32.totalorder %s309, %s311
      %p318 = scmp.eq.s32.totalorder %s28, 1
      %p319 = por %p317, %p318
      %p320 = scmp.ne.s32.totalorder %s311, %s312
      %p321 = scmp.eq.s32.totalorder %s28, 0
      %p322 = por %p320, %p321
      %p323 = scmp.ne.s32.totalorder %s311, %s312
      %p324 = scmp.eq.s32.totalorder %s29, 1
      %p325 = por %p323, %p324
      %p327 = scmp.ne.s32.totalorder %s312, %s326
      %p328 = scmp.eq.s32.totalorder %s29, 0
      %p329 = por %p327, %p328
      %s330 = ssub.s32 %s23, %s30
      %p331 = scmp.eq.s32.totalorder %s330, 0
      %s333 = sadd.s32 %s332, 1
      %s334 = scalar_select %p331, %s332, %s333
      %p337 = pneg %p331
      %p338 = scmp.eq.s32.totalorder %s23, 1
      %p339 = por %p337, %p338
      %p340 = scmp.ne.s32.totalorder %s332, %s335
      %p341 = scmp.eq.s32.totalorder %s23, 0
      %p342 = por %p340, %p341
      %p343 = scmp.ne.s32.totalorder %s332, %s335
      %p344 = scmp.eq.s32.totalorder %s28, 1
      %p345 = por %p343, %p344
      %p346 = scmp.ne.s32.totalorder %s335, %s336
      %p347 = scmp.eq.s32.totalorder %s28, 0
      %p348 = por %p346, %p347
      %p349 = scmp.ne.s32.totalorder %s335, %s336
      %p350 = scmp.eq.s32.totalorder %s29, 1
      %p351 = por %p349, %p350
      %p353 = scmp.ne.s32.totalorder %s336, %s352
      %p354 = scmp.eq.s32.totalorder %s29, 0
      %p355 = por %p353, %p354
      %p356 = scmp.le.s32.totalorder 1, %s23
      %p357 = scmp.lt.s32.totalorder %s23, 3
      %p358 = pnand %p356, %p357
      %p359 = pneg %p358
      // Predicated region
      $region9: #{tpu_custom_call.1} parent=5 // pred_check
        _
      $region10: #{tpu_custom_call.1} parent=5 // pred_check_branch
        %361 = sbr.rel (%p358) target = $region12
      $region11: #{tpu_custom_call.1} parent=5 // pred_region
        %s362 = ssub.s32 %s23, 1
        // Predicated region
        $region13: #{tpu_custom_call.1} parent=11 // pred_check
          %p363 = pneg %p70
        $region14: #{tpu_custom_call.1} parent=11 // pred_check_branch
          %365 = sbr.rel (%p363) target = $region16
        $region15: #{tpu_custom_call.1} parent=11 // pred_region
          _
        $region16: #{tpu_custom_call.1} parent=11 // pred_fallthru
          _
        // Predicated region
        $region17: #{tpu_custom_call.1} parent=11 // pred_check
          %p366 = pneg %p91
        $region18: #{tpu_custom_call.1} parent=11 // pred_check_branch
          %368 = sbr.rel (%p366) target = $region20
        $region19: #{tpu_custom_call.1} parent=11 // pred_region
          _
        $region20: #{tpu_custom_call.1} parent=11 // pred_fallthru
          _
        // Predicated region
        $region21: #{tpu_custom_call.1} parent=11 // pred_check
          %p369 = pneg %p112
        $region22: #{tpu_custom_call.1} parent=11 // pred_check_branch
          %371 = sbr.rel (%p369) target = $region24
        $region23: #{tpu_custom_call.1} parent=11 // pred_region
          _
        $region24: #{tpu_custom_call.1} parent=11 // pred_fallthru
          _
        // Predicated region
        $region25: #{tpu_custom_call.1} parent=11 // pred_check
          %p372 = pneg %p133
        $region26: #{tpu_custom_call.1} parent=11 // pred_check_branch
          %374 = sbr.rel (%p372) target = $region28
        $region27: #{tpu_custom_call.1} parent=11 // pred_region
          _
        $region28: #{tpu_custom_call.1} parent=11 // pred_fallthru
          _
        // Predicated region
        $region29: #{tpu_custom_call.1} parent=11 // pred_check
          %p375 = pneg %p154
        $region30: #{tpu_custom_call.1} parent=11 // pred_check_branch
          %377 = sbr.rel (%p375) target = $region32
        $region31: #{tpu_custom_call.1} parent=11 // pred_region
          _
        $region32: #{tpu_custom_call.1} parent=11 // pred_fallthru
          _
        // Predicated region
        $region33: #{tpu_custom_call.1} parent=11 // pred_check
          %p378 = pneg %p175
        $region34: #{tpu_custom_call.1} parent=11 // pred_check_branch
          %380 = sbr.rel (%p378) target = $region36
        $region35: #{tpu_custom_call.1} parent=11 // pred_region
          _
        $region36: #{tpu_custom_call.1} parent=11 // pred_fallthru
          _
        // Predicated region
        $region37: #{tpu_custom_call.1} parent=11 // pred_check
          %p381 = pneg %p196
        $region38: #{tpu_custom_call.1} parent=11 // pred_check_branch
          %383 = sbr.rel (%p381) target = $region40
        $region39: #{tpu_custom_call.1} parent=11 // pred_region
          _
        $region40: #{tpu_custom_call.1} parent=11 // pred_fallthru
          _
        // Predicated region
        $region41: #{tpu_custom_call.1} parent=11 // pred_check
          %p384 = pneg %p217
        $region42: #{tpu_custom_call.1} parent=11 // pred_check_branch
          %386 = sbr.rel (%p384) target = $region44
        $region43: #{tpu_custom_call.1} parent=11 // pred_region
          _
        $region44: #{tpu_custom_call.1} parent=11 // pred_fallthru
          _
        // Predicated region
        $region45: #{tpu_custom_call.1} parent=11 // pred_check
          %p387 = pneg %p238
        $region46: #{tpu_custom_call.1} parent=11 // pred_check_branch
          %389 = sbr.rel (%p387) target = $region48
        $region47: #{tpu_custom_call.1} parent=11 // pred_region
          _
        $region48: #{tpu_custom_call.1} parent=11 // pred_fallthru
          _
        // Predicated region
        $region49: #{tpu_custom_call.1} parent=11 // pred_check
          %p390 = pneg %p259
        $region50: #{tpu_custom_call.1} parent=11 // pred_check_branch
          %392 = sbr.rel (%p390) target = $region52
        $region51: #{tpu_custom_call.1} parent=11 // pred_region
          _
        $region52: #{tpu_custom_call.1} parent=11 // pred_fallthru
          _
        // Predicated region
        $region53: #{tpu_custom_call.1} parent=11 // pred_check
          %p393 = pneg %p280
        $region54: #{tpu_custom_call.1} parent=11 // pred_check_branch
          %395 = sbr.rel (%p393) target = $region56
        $region55: #{tpu_custom_call.1} parent=11 // pred_region
          _
        $region56: #{tpu_custom_call.1} parent=11 // pred_fallthru
          _
        // Predicated region
        $region57: #{tpu_custom_call.1} parent=11 // pred_check
          %p396 = pneg %p301
        $region58: #{tpu_custom_call.1} parent=11 // pred_check_branch
          %398 = sbr.rel (%p396) target = $region60
        $region59: #{tpu_custom_call.1} parent=11 // pred_region
          _
        $region60: #{tpu_custom_call.1} parent=11 // pred_fallthru
          _
        // Predicated region
        $region61: #{tpu_custom_call.1} parent=11 // pred_check
          %p399 = pneg %p322
        $region62: #{tpu_custom_call.1} parent=11 // pred_check_branch
          %401 = sbr.rel (%p399) target = $region64
        $region63: #{tpu_custom_call.1} parent=11 // pred_region
          _
        $region64: #{tpu_custom_call.1} parent=11 // pred_fallthru
          _
      $region12: #{tpu_custom_call.1} parent=5 // pred_fallthru
        _
      %p402 = scmp.lt.s32.totalorder %s23, 2
      // Predicated region
      $region65: #{tpu_custom_call.1} parent=5 // pred_check
        %p403 = pneg %p402
      $region66: #{tpu_custom_call.1} parent=5 // pred_check_branch
        %405 = sbr.rel (%p403) target = $region68
      $region67: #{tpu_custom_call.1} parent=5 // pred_region
        // Predicated region
        $region69: #{tpu_custom_call.1} parent=67 // pred_check
          %p406 = pneg %p43
        $region70: #{tpu_custom_call.1} parent=67 // pred_check_branch
          %408 = sbr.rel (%p406) target = $region72
        $region71: #{tpu_custom_call.1} parent=67 // pred_region
          %s409 = smul.u32 16, %s23
          %p410 = scmp.lt.s32.totalorder %s409, 31
          %s411 = scalar_select %p410, %s409, 31
          %s412 = smul.addr %s411, 4
          %s413 = scalar_lea.vmem %s0, %s412
          %s414 = smul.u32 16, %s23
        $region72: #{tpu_custom_call.1} parent=67 // pred_fallthru
          _
      $region68: #{tpu_custom_call.1} parent=5 // pred_fallthru
        _
      %p415 = scmp.le.s32.totalorder 1, %s23
      %p416 = scmp.lt.s32.totalorder %s23, 3
      %p417 = pnand %p415, %p416
      %p418 = pneg %p417
      // Predicated region
      $region73: #{tpu_custom_call.1} parent=5 // pred_check
        _
      $region74: #{tpu_custom_call.1} parent=5 // pred_check_branch
        %420 = sbr.rel (%p417) target = $region76
      $region75: #{tpu_custom_call.1} parent=5 // pred_region
        %s421 = ssub.s32 %s23, 1
        %s422 = smul.u32 16, %s28
        %p423 = scmp.lt.s32.totalorder %s422, 31
        %s424 = scalar_select %p423, %s422, 31
        %s425 = smul.addr %s424, 4
        %s426 = scalar_lea.vmem %s0, %s425
        %p427 = pneg %p49
        %p428 = pneg %p46
        %p429 = pneg %p70
        %p430 = pneg %p67
        %p431 = pneg %p91
        %p432 = pneg %p88
        %p433 = pneg %p112
        %p434 = pneg %p109
        %p435 = pneg %p133
        %p436 = pneg %p130
        %p437 = pneg %p154
        %p438 = pneg %p151
        %p439 = pneg %p175
        %p440 = pneg %p172
        %p441 = pneg %p196
        %p442 = pneg %p193
        %p443 = pneg %p217
        %p444 = pneg %p214
        %p445 = pneg %p238
        %p446 = pneg %p235
        %p447 = pneg %p259
        %p448 = pneg %p256
        %p449 = pneg %p280
        %p450 = pneg %p277
        %p451 = pneg %p301
        %p452 = pneg %p298
        %p453 = pneg %p322
        %p454 = pneg %p319
        %p455 = pneg %p348
        %p456 = pneg %p345
        %s457 = sand.u32 %s335, 1
        %s458 = scalar_lea.sflag [#allocation3], %s457
        %s459 = sand.u32 %s335, 1
        %s460 = smul.addr %s459, 16
        %s461 = scalar_lea.vmem [#allocation2], %s460
        %s462 = smul.u32 16, %s28
        %p463 = scmp.lt.s32.totalorder %s462, 31
        %s464 = scalar_select %p463, %s462, 31
        %s465 = smul.addr %s464, 4
        %s466 = scalar_lea.vmem %s0, %s465
        %s467 = smul.u32 16, %s28
        %v468 = vld [vmem:[%s466] sm:$0xf]
        %v469 = vld [vmem:[%s466 + $0x4] sm:$0xf]
        %v470 = vld [vmem:[%s466 + $0x8] sm:$0xf]
        %v471 = vld [vmem:[%s466 + $0xc] sm:$0xf]
        %v472 = vld [vmem:[%s466 + $0x10] sm:$0xf]
        %v473 = vld [vmem:[%s466 + $0x14] sm:$0xf]
        %v474 = vld [vmem:[%s466 + $0x18] sm:$0xf]
        %v475 = vld [vmem:[%s466 + $0x1c] sm:$0xf]
        %v476 = vld [vmem:[%s466 + $0x20] sm:$0xf]
        %v477 = vld [vmem:[%s466 + $0x24] sm:$0xf]
        %v478 = vld [vmem:[%s466 + $0x28] sm:$0xf]
        %v479 = vld [vmem:[%s466 + $0x2c] sm:$0xf]
        %v480 = vld [vmem:[%s466 + $0x30] sm:$0xf]
        %v481 = vld [vmem:[%s466 + $0x34] sm:$0xf]
        %v482 = vld [vmem:[%s466 + $0x38] sm:$0xf]
        %v483 = vld [vmem:[%s466 + $0x3c] sm:$0xf]
        %v484 = vunpack.c.l.bf16 %v468
        %v485 = vunpack.c.l.bf16 %v469
        %v486 = vunpack.c.l.bf16 %v470
        %v487 = vunpack.c.l.bf16 %v471
        %v488 = vunpack.c.l.bf16 %v472
        %v489 = vunpack.c.l.bf16 %v473
        %v490 = vunpack.c.l.bf16 %v474
        %v491 = vunpack.c.l.bf16 %v475
        %v492 = vunpack.c.l.bf16 %v476
        %v493 = vunpack.c.l.bf16 %v477
        %v494 = vunpack.c.l.bf16 %v478
        %v495 = vunpack.c.l.bf16 %v479
        %v496 = vunpack.c.l.bf16 %v480
        %v497 = vunpack.c.l.bf16 %v481
        %v498 = vunpack.c.l.bf16 %v482
        %v499 = vunpack.c.l.bf16 %v483
        %v500 = vld [vmem:[%s1] sm:$0xf]
        %v501 = vld [vmem:[%s1 + $0x4] sm:$0xf]
        %v502 = vld [vmem:[%s1 + $0x8] sm:$0xf]
        %v503 = vld [vmem:[%s1 + $0xc] sm:$0xf]
        %v504 = vunpack.c.l.bf16 %v500
        %v505 = vunpack.c.l.bf16 %v501
        %v506 = vunpack.c.l.bf16 %v502
        %v507 = vunpack.c.l.bf16 %v503
        %v508 = vld [vmem:[%s2] sm:$0x1]
        %v509 = vunpack.c.l.bf16 %v508
        %v510 = vlaneseq
        %v511 = vshrl.u32 %v510, 7
        %v512 = vsub.s32 0, %v511
        %v513 = vrot.slane %v509, %v512
        %vm514 = vcmask 261120
        %v516 = vsel %vm514, %v484, 0
        %v519 = vsel %vm514, %v485, 0
        %v522 = vsel %vm514, %v486, 0
        %v525 = vsel %vm514, %v487, 0
        %v528 = vsel %vm514, %v488, 0
        %v531 = vsel %vm514, %v489, 0
        %v534 = vsel %vm514, %v490, 0
        %v537 = vsel %vm514, %v491, 0
        %v540 = vsel %vm514, %v492, 0
        %v543 = vsel %vm514, %v493, 0
        %v546 = vsel %vm514, %v494, 0
        %v549 = vsel %vm514, %v495, 0
        %v552 = vsel %vm514, %v496, 0
        %v555 = vsel %vm514, %v497, 0
        %v558 = vsel %vm514, %v498, 0
        %v561 = vsel %vm514, %v499, 0
        %563 = vmatprep.subr.mxu0 0.0
        %564 = vmatpush1.msra.mxu0 0.0
        %565 = vmatprep.subr.mxu0 0.0
        %566 = vmatpush1.msra.mxu0 0.0
        %567 = vmatprep.subr.mxu0 0.0
        %568 = vmatpush1.msra.mxu0 0.0
        %569 = vmatprep.subr.mxu0 0.0
        %570 = vmatpush1.msra.mxu0 0.0
        %571 = vmatprep.subr.mxu0 0.0
        %572 = vmatpush1.msra.mxu0 0.0
        %573 = vmatprep.subr.mxu0 0.0
        %574 = vmatpush1.msra.mxu0 0.0
        %575 = vmatprep.subr.mxu0 0.0
        %576 = vmatpush1.msra.mxu0 0.0
        %577 = vmatprep.subr.mxu0 0.0
        %578 = vmatpush1.msra.mxu0 0.0
        %579 = vmatprep.subr.mxu0 0.0
        %580 = vmatpush1.msra.mxu0 0.0
        %581 = vmatprep.subr.mxu0 0.0
        %582 = vmatpush1.msra.mxu0 0.0
        %583 = vmatprep.subr.mxu0 0.0
        %584 = vmatpush1.msra.mxu0 0.0
        %585 = vmatprep.subr.mxu0 0.0
        %586 = vmatpush1.msra.mxu0 0.0
        %587 = vmatprep.subr.mxu0 0.0
        %588 = vmatpush1.msra.mxu0 %v507
        %589 = vmatprep.subr.mxu0 0.0
        %590 = vmatpush1.msra.mxu0 %v506
        %591 = vmatprep.subr.mxu0 0.0
        %592 = vmatpush1.msra.mxu0 %v505
        %593 = vmatprep.subr.mxu0 0.0
        %594 = vmatpush1.msra.mxu0 %v504
        %595 = vmatprep.subr.mxu0 0.0
        %596 = vmatpush2.msra.mxu0 0.0
        %597 = vmatprep.subr.mxu0 0.0
        %598 = vmatpush2.msra.mxu0 0.0
        %599 = vmatprep.subr.mxu0 0.0
        %600 = vmatpush2.msra.mxu0 0.0
        %601 = vmatprep.subr.mxu0 0.0
        %602 = vmatpush2.msra.mxu0 0.0
        %603 = vmatprep.subr.mxu0 0.0
        %604 = vmatpush2.msra.mxu0 0.0
        %605 = vmatprep.subr.mxu0 0.0
        %606 = vmatpush2.msra.mxu0 0.0
        %607 = vmatprep.subr.mxu0 0.0
        %608 = vmatpush2.msra.mxu0 0.0
        %609 = vmatprep.subr.mxu0 0.0
        %610 = vmatpush2.msra.mxu0 0.0
        %611 = vmatprep.subr.mxu0 0.0
        %612 = vmatpush2.msra.mxu0 0.0
        %613 = vmatprep.subr.mxu0 0.0
        %614 = vmatpush2.msra.mxu0 0.0
        %615 = vmatprep.subr.mxu0 0.0
        %616 = vmatpush2.msra.mxu0 0.0
        %617 = vmatprep.subr.mxu0 0.0
        %618 = vmatpush2.msra.mxu0 0.0
        %619 = vmatprep.subr.mxu0 0.0
        %620 = vmatpush2.msra.mxu0 0.0
        %621 = vmatprep.subr.mxu0 0.0
        %622 = vmatpush2.msra.mxu0 0.0
        %623 = vmatprep.subr.mxu0 0.0
        %624 = vmatpush2.msra.mxu0 0.0
        %625 = vmatprep.subr.mxu0 0.0
        %626 = vmatpush2.msra.mxu0 0.0
        %627 = vmatprep.mubr.f32.mxu0 0.0
        %628 = vmatmul.mubr.f32.gmra.mxu0 %v516
        %v629 = vpop.f32.mrf.mxu0
        %v630 = vadd.f32 %v513, %v629
        %v631 = vpop.f32.mrf.mxu0
        %632 = vmatprep.mubr.f32.mxu0 0.0
        %633 = vmatmul.mubr.f32.gmra.mxu0 %v519
        %v634 = vpop.f32.mrf.mxu0
        %v635 = vadd.f32 %v513, %v634
        %v636 = vpop.f32.mrf.mxu0
        %637 = vmatprep.mubr.f32.mxu0 0.0
        %638 = vmatmul.mubr.f32.gmra.mxu0 %v522
        %v639 = vpop.f32.mrf.mxu0
        %v640 = vadd.f32 %v513, %v639
        %v641 = vpop.f32.mrf.mxu0
        %642 = vmatprep.mubr.f32.mxu0 0.0
        %643 = vmatmul.mubr.f32.gmra.mxu0 %v525
        %v644 = vpop.f32.mrf.mxu0
        %v645 = vadd.f32 %v513, %v644
        %v646 = vpop.f32.mrf.mxu0
        %647 = vmatprep.mubr.f32.mxu0 0.0
        %648 = vmatmul.mubr.f32.gmra.mxu0 %v528
        %v649 = vpop.f32.mrf.mxu0
        %v650 = vadd.f32 %v513, %v649
        %v651 = vpop.f32.mrf.mxu0
        %652 = vmatprep.mubr.f32.mxu0 0.0
        %653 = vmatmul.mubr.f32.gmra.mxu0 %v531
        %v654 = vpop.f32.mrf.mxu0
        %v655 = vadd.f32 %v513, %v654
        %v656 = vpop.f32.mrf.mxu0
        %657 = vmatprep.mubr.f32.mxu0 0.0
        %658 = vmatmul.mubr.f32.gmra.mxu0 %v534
        %v659 = vpop.f32.mrf.mxu0
        %v660 = vadd.f32 %v513, %v659
        %v661 = vpop.f32.mrf.mxu0
        %662 = vmatprep.mubr.f32.mxu0 0.0
        %663 = vmatmul.mubr.f32.gmra.mxu0 %v537
        %v664 = vpop.f32.mrf.mxu0
        %v665 = vadd.f32 %v513, %v664
        %v666 = vpop.f32.mrf.mxu0
        %667 = vmatprep.mubr.f32.mxu0 0.0
        %668 = vmatmul.mubr.f32.gmra.mxu0 %v540
        %v669 = vpop.f32.mrf.mxu0
        %v670 = vadd.f32 %v513, %v669
        %v671 = vpop.f32.mrf.mxu0
        %672 = vmatprep.mubr.f32.mxu0 0.0
        %673 = vmatmul.mubr.f32.gmra.mxu0 %v543
        %v674 = vpop.f32.mrf.mxu0
        %v675 = vadd.f32 %v513, %v674
        %v676 = vpop.f32.mrf.mxu0
        %677 = vmatprep.mubr.f32.mxu0 0.0
        %678 = vmatmul.mubr.f32.gmra.mxu0 %v546
        %v679 = vpop.f32.mrf.mxu0
        %v680 = vadd.f32 %v513, %v679
        %v681 = vpop.f32.mrf.mxu0
        %682 = vmatprep.mubr.f32.mxu0 0.0
        %683 = vmatmul.mubr.f32.gmra.mxu0 %v549
        %v684 = vpop.f32.mrf.mxu0
        %v685 = vadd.f32 %v513, %v684
        %v686 = vpop.f32.mrf.mxu0
        %687 = vmatprep.mubr.f32.mxu0 0.0
        %688 = vmatmul.mubr.f32.gmra.mxu0 %v552
        %v689 = vpop.f32.mrf.mxu0
        %v690 = vadd.f32 %v513, %v689
        %v691 = vpop.f32.mrf.mxu0
        %692 = vmatprep.mubr.f32.mxu0 0.0
        %693 = vmatmul.mubr.f32.gmra.mxu0 %v555
        %v694 = vpop.f32.mrf.mxu0
        %v695 = vadd.f32 %v513, %v694
        %v696 = vpop.f32.mrf.mxu0
        %697 = vmatprep.mubr.f32.mxu0 0.0
        %698 = vmatmul.mubr.f32.gmra.mxu0 %v558
        %v699 = vpop.f32.mrf.mxu0
        %v700 = vadd.f32 %v513, %v699
        %v701 = vpop.f32.mrf.mxu0
        %702 = vmatprep.mubr.f32.mxu0 0.0
        %703 = vmatmul.mubr.f32.gmra.mxu0 %v561
        %v704 = vpop.f32.mrf.mxu0
        %v705 = vadd.f32 %v513, %v704
        %v706 = vpop.f32.mrf.mxu0
        %707 = vdwg.mxu0
        %v708 = vld [vmem:[%s3] sm:$0xff]
        %v709 = vld [vmem:[%s3 + $0x8] sm:$0xff]
        %v710 = vld [vmem:[%s3 + $0x10] sm:$0xff]
        %v711 = vld [vmem:[%s3 + $0x18] sm:$0xff]
        %v712 = vld [vmem:[%s3 + $0x20] sm:$0xff]
        %v713 = vld [vmem:[%s3 + $0x28] sm:$0xff]
        %v714 = vld [vmem:[%s3 + $0x30] sm:$0xff]
        %v715 = vld [vmem:[%s3 + $0x38] sm:$0xff]
        %v716 = vld [vmem:[%s4] sm:$0x1]
        %v717 = vunpack.c.l.bf16 %v716
        %v718 = vld [vmem:[%s5] sm:$0x1]
        %v719 = vunpack.c.l.bf16 %v718
        %v720 = vld [vmem:[%s6] sm:$0xf]
        %v721 = vld [vmem:[%s6 + $0x4] sm:$0xf]
        %v722 = vld [vmem:[%s6 + $0x8] sm:$0xf]
        %v723 = vld [vmem:[%s6 + $0xc] sm:$0xf]
        %v724 = vld [vmem:[%s6 + $0x10] sm:$0xf]
        %v725 = vld [vmem:[%s6 + $0x14] sm:$0xf]
        %v726 = vld [vmem:[%s6 + $0x18] sm:$0xf]
        %v727 = vld [vmem:[%s6 + $0x1c] sm:$0xf]
        %v728 = vunpack.c.l.bf16 %v720
        %v729 = vunpack.c.l.bf16 %v721
        %v730 = vunpack.c.l.bf16 %v722
        %v731 = vunpack.c.l.bf16 %v723
        %v732 = vunpack.c.l.bf16 %v724
        %v733 = vunpack.c.l.bf16 %v725
        %v734 = vunpack.c.l.bf16 %v726
        %v735 = vunpack.c.l.bf16 %v727
        %v736 = vld [vmem:[%s7] sm:$0x1]
        %v737 = vunpack.c.l.bf16 %v736
        %vm738 = vcmask 523264
        %v740 = vsel %vm738, %v630, 0
        %v743 = vsel %vm738, %v635, 0
        %v746 = vsel %vm738, %v640, 0
        %v749 = vsel %vm738, %v645, 0
        %v752 = vsel %vm738, %v650, 0
        %v755 = vsel %vm738, %v655, 0
        %v758 = vsel %vm738, %v660, 0
        %v761 = vsel %vm738, %v665, 0
        %v764 = vsel %vm738, %v670, 0
        %v767 = vsel %vm738, %v675, 0
        %v770 = vsel %vm738, %v680, 0
        %v773 = vsel %vm738, %v685, 0
        %v776 = vsel %vm738, %v690, 0
        %v779 = vsel %vm738, %v695, 0
        %v782 = vsel %vm738, %v700, 0
        %v785 = vsel %vm738, %v705, 0
        %787 = vmatprep.subr.mxu0 0.0
        %788 = vmatpush1.msra.mxu0 0.0
        %789 = vmatprep.subr.mxu0 0.0
        %790 = vmatpush1.msra.mxu0 0.0
        %791 = vmatprep.subr.mxu0 0.0
        %792 = vmatpush1.msra.mxu0 0.0
        %793 = vmatprep.subr.mxu0 0.0
        %794 = vmatpush1.msra.mxu0 0.0
        %795 = vmatprep.subr.mxu0 0.0
        %796 = vmatpush1.msra.mxu0 0.0
        %797 = vmatprep.subr.mxu0 0.0
        %798 = vmatpush1.msra.mxu0 0.0
        %799 = vmatprep.subr.mxu0 0.0
        %800 = vmatpush1.msra.mxu0 0.0
        %801 = vmatprep.subr.mxu0 0.0
        %802 = vmatpush1.msra.mxu0 0.0
        %803 = vmatprep.subr.mxu0 0.0
        %804 = vmatpush1.msra.mxu0 %v715
        %805 = vmatprep.subr.mxu0 0.0
        %806 = vmatpush1.msra.mxu0 %v714
        %807 = vmatprep.subr.mxu0 0.0
        %808 = vmatpush1.msra.mxu0 %v713
        %809 = vmatprep.subr.mxu0 0.0
        %810 = vmatpush1.msra.mxu0 %v712
        %811 = vmatprep.subr.mxu0 0.0
        %812 = vmatpush1.msra.mxu0 %v711
        %813 = vmatprep.subr.mxu0 0.0
        %814 = vmatpush1.msra.mxu0 %v710
        %815 = vmatprep.subr.mxu0 0.0
        %816 = vmatpush1.msra.mxu0 %v709
        %817 = vmatprep.subr.mxu0 0.0
        %818 = vmatpush1.msra.mxu0 %v708
        %819 = vmatprep.subr.mxu0 0.0
        %820 = vmatpush2.msra.mxu0 0.0
        %821 = vmatprep.subr.mxu0 0.0
        %822 = vmatpush2.msra.mxu0 0.0
        %823 = vmatprep.subr.mxu0 0.0
        %824 = vmatpush2.msra.mxu0 0.0
        %825 = vmatprep.subr.mxu0 0.0
        %826 = vmatpush2.msra.mxu0 0.0
        %827 = vmatprep.subr.mxu0 0.0
        %828 = vmatpush2.msra.mxu0 0.0
        %829 = vmatprep.subr.mxu0 0.0
        %830 = vmatpush2.msra.mxu0 0.0
        %831 = vmatprep.subr.mxu0 0.0
        %832 = vmatpush2.msra.mxu0 0.0
        %833 = vmatprep.subr.mxu0 0.0
        %834 = vmatpush2.msra.mxu0 0.0
        %835 = vmatprep.subr.mxu0 0.0
        %836 = vmatpush2.msra.mxu0 0.0
        %837 = vmatprep.subr.mxu0 0.0
        %838 = vmatpush2.msra.mxu0 0.0
        %839 = vmatprep.subr.mxu0 0.0
        %840 = vmatpush2.msra.mxu0 0.0
        %841 = vmatprep.subr.mxu0 0.0
        %842 = vmatpush2.msra.mxu0 0.0
        %843 = vmatprep.subr.mxu0 0.0
        %844 = vmatpush2.msra.mxu0 0.0
        %845 = vmatprep.subr.mxu0 0.0
        %846 = vmatpush2.msra.mxu0 0.0
        %847 = vmatprep.subr.mxu0 0.0
        %848 = vmatpush2.msra.mxu0 0.0
        %849 = vmatprep.subr.mxu0 0.0
        %850 = vmatpush2.msra.mxu0 0.0
        %851 = vmatprep.mubr.f32.mxu0 0.0
        %852 = vmatmul.mubr.f32.gmra.mxu0 %v740
        %v853 = vpop.f32.mrf.mxu0
        %v854 = vadd.f32 0.0, %v853
        %v855 = vpop.f32.mrf.mxu0
        %856 = vmatprep.mubr.f32.mxu0 0.0
        %857 = vmatmul.mubr.f32.gmra.mxu0 %v743
        %v858 = vpop.f32.mrf.mxu0
        %v859 = vadd.f32 0.0, %v858
        %v860 = vpop.f32.mrf.mxu0
        %861 = vmatprep.mubr.f32.mxu0 0.0
        %862 = vmatmul.mubr.f32.gmra.mxu0 %v746
        %v863 = vpop.f32.mrf.mxu0
        %v864 = vadd.f32 0.0, %v863
        %v865 = vpop.f32.mrf.mxu0
        %866 = vmatprep.mubr.f32.mxu0 0.0
        %867 = vmatmul.mubr.f32.gmra.mxu0 %v749
        %v868 = vpop.f32.mrf.mxu0
        %v869 = vadd.f32 0.0, %v868
        %v870 = vpop.f32.mrf.mxu0
        %871 = vmatprep.mubr.f32.mxu0 0.0
        %872 = vmatmul.mubr.f32.gmra.mxu0 %v752
        %v873 = vpop.f32.mrf.mxu0
        %v874 = vadd.f32 0.0, %v873
        %v875 = vpop.f32.mrf.mxu0
        %876 = vmatprep.mubr.f32.mxu0 0.0
        %877 = vmatmul.mubr.f32.gmra.mxu0 %v755
        %v878 = vpop.f32.mrf.mxu0
        %v879 = vadd.f32 0.0, %v878
        %v880 = vpop.f32.mrf.mxu0
        %881 = vmatprep.mubr.f32.mxu0 0.0
        %882 = vmatmul.mubr.f32.gmra.mxu0 %v758
        %v883 = vpop.f32.mrf.mxu0
        %v884 = vadd.f32 0.0, %v883
        %v885 = vpop.f32.mrf.mxu0
        %886 = vmatprep.mubr.f32.mxu0 0.0
        %887 = vmatmul.mubr.f32.gmra.mxu0 %v761
        %v888 = vpop.f32.mrf.mxu0
        %v889 = vadd.f32 0.0, %v888
        %v890 = vpop.f32.mrf.mxu0
        %891 = vmatprep.mubr.f32.mxu0 0.0
        %892 = vmatmul.mubr.f32.gmra.mxu0 %v764
        %v893 = vpop.f32.mrf.mxu0
        %v894 = vadd.f32 0.0, %v893
        %v895 = vpop.f32.mrf.mxu0
        %896 = vmatprep.mubr.f32.mxu0 0.0
        %897 = vmatmul.mubr.f32.gmra.mxu0 %v767
        %v898 = vpop.f32.mrf.mxu0
        %v899 = vadd.f32 0.0, %v898
        %v900 = vpop.f32.mrf.mxu0
        %901 = vmatprep.mubr.f32.mxu0 0.0
        %902 = vmatmul.mubr.f32.gmra.mxu0 %v770
        %v903 = vpop.f32.mrf.mxu0
        %v904 = vadd.f32 0.0, %v903
        %v905 = vpop.f32.mrf.mxu0
        %906 = vmatprep.mubr.f32.mxu0 0.0
        %907 = vmatmul.mubr.f32.gmra.mxu0 %v773
        %v908 = vpop.f32.mrf.mxu0
        %v909 = vadd.f32 0.0, %v908
        %v910 = vpop.f32.mrf.mxu0
        %911 = vmatprep.mubr.f32.mxu0 0.0
        %912 = vmatmul.mubr.f32.gmra.mxu0 %v776
        %v913 = vpop.f32.mrf.mxu0
        %v914 = vadd.f32 0.0, %v913
        %v915 = vpop.f32.mrf.mxu0
        %916 = vmatprep.mubr.f32.mxu0 0.0
        %917 = vmatmul.mubr.f32.gmra.mxu0 %v779
        %v918 = vpop.f32.mrf.mxu0
        %v919 = vadd.f32 0.0, %v918
        %v920 = vpop.f32.mrf.mxu0
        %921 = vmatprep.mubr.f32.mxu0 0.0
        %922 = vmatmul.mubr.f32.gmra.mxu0 %v782
        %v923 = vpop.f32.mrf.mxu0
        %v924 = vadd.f32 0.0, %v923
        %v925 = vpop.f32.mrf.mxu0
        %926 = vmatprep.mubr.f32.mxu0 0.0
        %927 = vmatmul.mubr.f32.gmra.mxu0 %v785
        %v928 = vpop.f32.mrf.mxu0
        %v929 = vadd.f32 0.0, %v928
        %v930 = vpop.f32.mrf.mxu0
        %931 = vdwg.mxu0
        %v932 = vsub.f32 %v630, %v854
        %v933 = vsub.f32 %v635, %v859
        %v934 = vsub.f32 %v640, %v864
        %v935 = vsub.f32 %v645, %v869
        %v936 = vsub.f32 %v650, %v874
        %v937 = vsub.f32 %v655, %v879
        %v938 = vsub.f32 %v660, %v884
        %v939 = vsub.f32 %v665, %v889
        %v940 = vsub.f32 %v670, %v894
        %v941 = vsub.f32 %v675, %v899
        %v942 = vsub.f32 %v680, %v904
        %v943 = vsub.f32 %v685, %v909
        %v944 = vsub.f32 %v690, %v914
        %v945 = vsub.f32 %v695, %v919
        %v946 = vsub.f32 %v700, %v924
        %v947 = vsub.f32 %v705, %v929
        %v948 = vmul.f32 %v932, %v932
        %v949 = vmul.f32 %v933, %v933
        %v950 = vmul.f32 %v934, %v934
        %v951 = vmul.f32 %v935, %v935
        %v952 = vmul.f32 %v936, %v936
        %v953 = vmul.f32 %v937, %v937
        %v954 = vmul.f32 %v938, %v938
        %v955 = vmul.f32 %v939, %v939
        %v956 = vmul.f32 %v940, %v940
        %v957 = vmul.f32 %v941, %v941
        %v958 = vmul.f32 %v942, %v942
        %v959 = vmul.f32 %v943, %v943
        %v960 = vmul.f32 %v944, %v944
        %v961 = vmul.f32 %v945, %v945
        %v962 = vmul.f32 %v946, %v946
        %v963 = vmul.f32 %v947, %v947
        %v965 = vsel %vm738, %v948, 0
        %v968 = vsel %vm738, %v949, 0
        %v971 = vsel %vm738, %v950, 0
        %v974 = vsel %vm738, %v951, 0
        %v977 = vsel %vm738, %v952, 0
        %v980 = vsel %vm738, %v953, 0
        %v983 = vsel %vm738, %v954, 0
        %v986 = vsel %vm738, %v955, 0
        %v989 = vsel %vm738, %v956, 0
        %v992 = vsel %vm738, %v957, 0
        %v995 = vsel %vm738, %v958, 0
        %v998 = vsel %vm738, %v959, 0
        %v1001 = vsel %vm738, %v960, 0
        %v1004 = vsel %vm738, %v961, 0
        %v1007 = vsel %vm738, %v962, 0
        %v1010 = vsel %vm738, %v963, 0
        %1012 = vmatprep.subr.mxu0 0.0
        %1013 = vmatpush1.msra.mxu0 0.0
        %1014 = vmatprep.subr.mxu0 0.0
        %1015 = vmatpush1.msra.mxu0 0.0
        %1016 = vmatprep.subr.mxu0 0.0
        %1017 = vmatpush1.msra.mxu0 0.0
        %1018 = vmatprep.subr.mxu0 0.0
        %1019 = vmatpush1.msra.mxu0 0.0
        %1020 = vmatprep.subr.mxu0 0.0
        %1021 = vmatpush1.msra.mxu0 0.0
        %1022 = vmatprep.subr.mxu0 0.0
        %1023 = vmatpush1.msra.mxu0 0.0
        %1024 = vmatprep.subr.mxu0 0.0
        %1025 = vmatpush1.msra.mxu0 0.0
        %1026 = vmatprep.subr.mxu0 0.0
        %1027 = vmatpush1.msra.mxu0 0.0
        %1028 = vmatprep.subr.mxu0 0.0
        %1029 = vmatpush1.msra.mxu0 %v715
        %1030 = vmatprep.subr.mxu0 0.0
        %1031 = vmatpush1.msra.mxu0 %v714
        %1032 = vmatprep.subr.mxu0 0.0
        %1033 = vmatpush1.msra.mxu0 %v713
        %1034 = vmatprep.subr.mxu0 0.0
        %1035 = vmatpush1.msra.mxu0 %v712
        %1036 = vmatprep.subr.mxu0 0.0
        %1037 = vmatpush1.msra.mxu0 %v711
        %1038 = vmatprep.subr.mxu0 0.0
        %1039 = vmatpush1.msra.mxu0 %v710
        %1040 = vmatprep.subr.mxu0 0.0
        %1041 = vmatpush1.msra.mxu0 %v709
        %1042 = vmatprep.subr.mxu0 0.0
        %1043 = vmatpush1.msra.mxu0 %v708
        %1044 = vmatprep.subr.mxu0 0.0
        %1045 = vmatpush2.msra.mxu0 0.0
        %1046 = vmatprep.subr.mxu0 0.0
        %1047 = vmatpush2.msra.mxu0 0.0
        %1048 = vmatprep.subr.mxu0 0.0
        %1049 = vmatpush2.msra.mxu0 0.0
        %1050 = vmatprep.subr.mxu0 0.0
        %1051 = vmatpush2.msra.mxu0 0.0
        %1052 = vmatprep.subr.mxu0 0.0
        %1053 = vmatpush2.msra.mxu0 0.0
        %1054 = vmatprep.subr.mxu0 0.0
        %1055 = vmatpush2.msra.mxu0 0.0
        %1056 = vmatprep.subr.mxu0 0.0
        %1057 = vmatpush2.msra.mxu0 0.0
        %1058 = vmatprep.subr.mxu0 0.0
        %1059 = vmatpush2.msra.mxu0 0.0
        %1060 = vmatprep.subr.mxu0 0.0
        %1061 = vmatpush2.msra.mxu0 0.0
        %1062 = vmatprep.subr.mxu0 0.0
        %1063 = vmatpush2.msra.mxu0 0.0
        %1064 = vmatprep.subr.mxu0 0.0
        %1065 = vmatpush2.msra.mxu0 0.0
        %1066 = vmatprep.subr.mxu0 0.0
        %1067 = vmatpush2.msra.mxu0 0.0
        %1068 = vmatprep.subr.mxu0 0.0
        %1069 = vmatpush2.msra.mxu0 0.0
        %1070 = vmatprep.subr.mxu0 0.0
        %1071 = vmatpush2.msra.mxu0 0.0
        %1072 = vmatprep.subr.mxu0 0.0
        %1073 = vmatpush2.msra.mxu0 0.0
        %1074 = vmatprep.subr.mxu0 0.0
        %1075 = vmatpush2.msra.mxu0 0.0
        %1076 = vmatprep.mubr.f32.mxu0 0.0
        %1077 = vmatmul.mubr.f32.gmra.mxu0 %v965
        %v1078 = vpop.f32.mrf.mxu0
        %v1079 = vadd.f32 1e-05, %v1078
        %v1080 = vpop.f32.mrf.mxu0
        %1081 = vmatprep.mubr.f32.mxu0 0.0
        %1082 = vmatmul.mubr.f32.gmra.mxu0 %v968
        %v1083 = vpop.f32.mrf.mxu0
        %v1084 = vadd.f32 1e-05, %v1083
        %v1085 = vpop.f32.mrf.mxu0
        %1086 = vmatprep.mubr.f32.mxu0 0.0
        %1087 = vmatmul.mubr.f32.gmra.mxu0 %v971
        %v1088 = vpop.f32.mrf.mxu0
        %v1089 = vadd.f32 1e-05, %v1088
        %v1090 = vpop.f32.mrf.mxu0
        %1091 = vmatprep.mubr.f32.mxu0 0.0
        %1092 = vmatmul.mubr.f32.gmra.mxu0 %v974
        %v1093 = vpop.f32.mrf.mxu0
        %v1094 = vadd.f32 1e-05, %v1093
        %v1095 = vpop.f32.mrf.mxu0
        %1096 = vmatprep.mubr.f32.mxu0 0.0
        %1097 = vmatmul.mubr.f32.gmra.mxu0 %v977
        %v1098 = vpop.f32.mrf.mxu0
        %v1099 = vadd.f32 1e-05, %v1098
        %v1100 = vpop.f32.mrf.mxu0
        %1101 = vmatprep.mubr.f32.mxu0 0.0
        %1102 = vmatmul.mubr.f32.gmra.mxu0 %v980
        %v1103 = vpop.f32.mrf.mxu0
        %v1104 = vadd.f32 1e-05, %v1103
        %v1105 = vpop.f32.mrf.mxu0
        %1106 = vmatprep.mubr.f32.mxu0 0.0
        %1107 = vmatmul.mubr.f32.gmra.mxu0 %v983
        %v1108 = vpop.f32.mrf.mxu0
        %v1109 = vadd.f32 1e-05, %v1108
        %v1110 = vpop.f32.mrf.mxu0
        %1111 = vmatprep.mubr.f32.mxu0 0.0
        %1112 = vmatmul.mubr.f32.gmra.mxu0 %v986
        %v1113 = vpop.f32.mrf.mxu0
        %v1114 = vadd.f32 1e-05, %v1113
        %v1115 = vpop.f32.mrf.mxu0
        %1116 = vmatprep.mubr.f32.mxu0 0.0
        %1117 = vmatmul.mubr.f32.gmra.mxu0 %v989
        %v1118 = vpop.f32.mrf.mxu0
        %v1119 = vadd.f32 1e-05, %v1118
        %v1120 = vpop.f32.mrf.mxu0
        %1121 = vmatprep.mubr.f32.mxu0 0.0
        %1122 = vmatmul.mubr.f32.gmra.mxu0 %v992
        %v1123 = vpop.f32.mrf.mxu0
        %v1124 = vadd.f32 1e-05, %v1123
        %v1125 = vpop.f32.mrf.mxu0
        %1126 = vmatprep.mubr.f32.mxu0 0.0
        %1127 = vmatmul.mubr.f32.gmra.mxu0 %v995
        %v1128 = vpop.f32.mrf.mxu0
        %v1129 = vadd.f32 1e-05, %v1128
        %v1130 = vpop.f32.mrf.mxu0
        %1131 = vmatprep.mubr.f32.mxu0 0.0
        %1132 = vmatmul.mubr.f32.gmra.mxu0 %v998
        %v1133 = vpop.f32.mrf.mxu0
        %v1134 = vadd.f32 1e-05, %v1133
        %v1135 = vpop.f32.mrf.mxu0
        %1136 = vmatprep.mubr.f32.mxu0 0.0
        %1137 = vmatmul.mubr.f32.gmra.mxu0 %v1001
        %v1138 = vpop.f32.mrf.mxu0
        %v1139 = vadd.f32 1e-05, %v1138
        %v1140 = vpop.f32.mrf.mxu0
        %1141 = vmatprep.mubr.f32.mxu0 0.0
        %1142 = vmatmul.mubr.f32.gmra.mxu0 %v1004
        %v1143 = vpop.f32.mrf.mxu0
        %v1144 = vadd.f32 1e-05, %v1143
        %v1145 = vpop.f32.mrf.mxu0
        %1146 = vmatprep.mubr.f32.mxu0 0.0
        %1147 = vmatmul.mubr.f32.gmra.mxu0 %v1007
        %v1148 = vpop.f32.mrf.mxu0
        %v1149 = vadd.f32 1e-05, %v1148
        %v1150 = vpop.f32.mrf.mxu0
        %1151 = vmatprep.mubr.f32.mxu0 0.0
        %1152 = vmatmul.mubr.f32.gmra.mxu0 %v1010
        %v1153 = vpop.f32.mrf.mxu0
        %v1154 = vadd.f32 1e-05, %v1153
        %v1155 = vpop.f32.mrf.mxu0
        %1156 = vdwg.mxu0
        %v1157 = vrsqrt.pop %v1079
        %v1158 = vrsqrt.pop %v1084
        %v1159 = vrsqrt.pop %v1089
        %v1160 = vrsqrt.pop %v1094
        %v1161 = vrsqrt.pop %v1099
        %v1162 = vrsqrt.pop %v1104
        %v1163 = vrsqrt.pop %v1109
        %v1164 = vrsqrt.pop %v1114
        %v1165 = vrsqrt.pop %v1119
        %v1166 = vrsqrt.pop %v1124
        %v1167 = vrsqrt.pop %v1129
        %v1168 = vrsqrt.pop %v1134
        %v1169 = vrsqrt.pop %v1139
        %v1170 = vrsqrt.pop %v1144
        %v1171 = vrsqrt.pop %v1149
        %v1172 = vrsqrt.pop %v1154
        %v1173 = vmul.f32 %v932, %v1157
        %v1174 = vmul.f32 %v933, %v1158
        %v1175 = vmul.f32 %v934, %v1159
        %v1176 = vmul.f32 %v935, %v1160
        %v1177 = vmul.f32 %v936, %v1161
        %v1178 = vmul.f32 %v937, %v1162
        %v1179 = vmul.f32 %v938, %v1163
        %v1180 = vmul.f32 %v939, %v1164
        %v1181 = vmul.f32 %v940, %v1165
        %v1182 = vmul.f32 %v941, %v1166
        %v1183 = vmul.f32 %v942, %v1167
        %v1184 = vmul.f32 %v943, %v1168
        %v1185 = vmul.f32 %v944, %v1169
        %v1186 = vmul.f32 %v945, %v1170
        %v1187 = vmul.f32 %v946, %v1171
        %v1188 = vmul.f32 %v947, %v1172
        %v1189 = vlaneseq
        %v1190 = vshrl.u32 %v1189, 7
        %v1191 = vsub.s32 0, %v1190
        %v1192 = vrot.slane %v717, %v1191
        %v1193 = vmul.f32 %v1173, %v1192
        %v1194 = vmul.f32 %v1174, %v1192
        %v1195 = vmul.f32 %v1175, %v1192
        %v1196 = vmul.f32 %v1176, %v1192
        %v1197 = vmul.f32 %v1177, %v1192
        %v1198 = vmul.f32 %v1178, %v1192
        %v1199 = vmul.f32 %v1179, %v1192
        %v1200 = vmul.f32 %v1180, %v1192
        %v1201 = vmul.f32 %v1181, %v1192
        %v1202 = vmul.f32 %v1182, %v1192
        %v1203 = vmul.f32 %v1183, %v1192
        %v1204 = vmul.f32 %v1184, %v1192
        %v1205 = vmul.f32 %v1185, %v1192
        %v1206 = vmul.f32 %v1186, %v1192
        %v1207 = vmul.f32 %v1187, %v1192
        %v1208 = vmul.f32 %v1188, %v1192
        %v1209 = vlaneseq
        %v1210 = vshrl.u32 %v1209, 7
        %v1211 = vsub.s32 0, %v1210
        %v1212 = vrot.slane %v719, %v1211
        %v1213 = vadd.f32 %v1193, %v1212
        %v1214 = vadd.f32 %v1194, %v1212
        %v1215 = vadd.f32 %v1195, %v1212
        %v1216 = vadd.f32 %v1196, %v1212
        %v1217 = vadd.f32 %v1197, %v1212
        %v1218 = vadd.f32 %v1198, %v1212
        %v1219 = vadd.f32 %v1199, %v1212
        %v1220 = vadd.f32 %v1200, %v1212
        %v1221 = vadd.f32 %v1201, %v1212
        %v1222 = vadd.f32 %v1202, %v1212
        %v1223 = vadd.f32 %v1203, %v1212
        %v1224 = vadd.f32 %v1204, %v1212
        %v1225 = vadd.f32 %v1205, %v1212
        %v1226 = vadd.f32 %v1206, %v1212
        %v1227 = vadd.f32 %v1207, %v1212
        %v1228 = vadd.f32 %v1208, %v1212
        %v1229 = vxor.u32 %v1213, 2147483648
        %v1230 = vxor.u32 %v1214, 2147483648
        %v1231 = vxor.u32 %v1215, 2147483648
        %v1232 = vxor.u32 %v1216, 2147483648
        %v1233 = vxor.u32 %v1217, 2147483648
        %v1234 = vxor.u32 %v1218, 2147483648
        %v1235 = vxor.u32 %v1219, 2147483648
        %v1236 = vxor.u32 %v1220, 2147483648
        %v1237 = vxor.u32 %v1221, 2147483648
        %v1238 = vxor.u32 %v1222, 2147483648
        %v1239 = vxor.u32 %v1223, 2147483648
        %v1240 = vxor.u32 %v1224, 2147483648
        %v1241 = vxor.u32 %v1225, 2147483648
        %v1242 = vxor.u32 %v1226, 2147483648
        %v1243 = vxor.u32 %v1227, 2147483648
        %v1244 = vxor.u32 %v1228, 2147483648
        %v1245 = vmul.f32 %v1229, 1.442695
        %v1246 = vpow.pop %v1245
        %v1247 = vmul.f32 %v1230, 1.442695
        %v1248 = vpow.pop %v1247
        %v1249 = vmul.f32 %v1231, 1.442695
        %v1250 = vpow.pop %v1249
        %v1251 = vmul.f32 %v1232, 1.442695
        %v1252 = vpow.pop %v1251
        %v1253 = vmul.f32 %v1233, 1.442695
        %v1254 = vpow.pop %v1253
        %v1255 = vmul.f32 %v1234, 1.442695
        %v1256 = vpow.pop %v1255
        %v1257 = vmul.f32 %v1235, 1.442695
        %v1258 = vpow.pop %v1257
        %v1259 = vmul.f32 %v1236, 1.442695
        %v1260 = vpow.pop %v1259
        %v1261 = vmul.f32 %v1237, 1.442695
        %v1262 = vpow.pop %v1261
        %v1263 = vmul.f32 %v1238, 1.442695
        %v1264 = vpow.pop %v1263
        %v1265 = vmul.f32 %v1239, 1.442695
        %v1266 = vpow.pop %v1265
        %v1267 = vmul.f32 %v1240, 1.442695
        %v1268 = vpow.pop %v1267
        %v1269 = vmul.f32 %v1241, 1.442695
        %v1270 = vpow.pop %v1269
        %v1271 = vmul.f32 %v1242, 1.442695
        %v1272 = vpow.pop %v1271
        %v1273 = vmul.f32 %v1243, 1.442695
        %v1274 = vpow.pop %v1273
        %v1275 = vmul.f32 %v1244, 1.442695
        %v1276 = vpow.pop %v1275
        %v1277 = vadd.f32 %v1246, 1.0
        %v1278 = vadd.f32 %v1248, 1.0
        %v1279 = vadd.f32 %v1250, 1.0
        %v1280 = vadd.f32 %v1252, 1.0
        %v1281 = vadd.f32 %v1254, 1.0
        %v1282 = vadd.f32 %v1256, 1.0
        %v1283 = vadd.f32 %v1258, 1.0
        %v1284 = vadd.f32 %v1260, 1.0
        %v1285 = vadd.f32 %v1262, 1.0
        %v1286 = vadd.f32 %v1264, 1.0
        %v1287 = vadd.f32 %v1266, 1.0
        %v1288 = vadd.f32 %v1268, 1.0
        %v1289 = vadd.f32 %v1270, 1.0
        %v1290 = vadd.f32 %v1272, 1.0
        %v1291 = vadd.f32 %v1274, 1.0
        %v1292 = vadd.f32 %v1276, 1.0
        %v1293 = vrcp.pop %v1277
        %v1294 = vmul.f32 1.0, %v1293
        %v1295 = vrcp.pop %v1278
        %v1296 = vmul.f32 1.0, %v1295
        %v1297 = vrcp.pop %v1279
        %v1298 = vmul.f32 1.0, %v1297
        %v1299 = vrcp.pop %v1280
        %v1300 = vmul.f32 1.0, %v1299
        %v1301 = vrcp.pop %v1281
        %v1302 = vmul.f32 1.0, %v1301
        %v1303 = vrcp.pop %v1282
        %v1304 = vmul.f32 1.0, %v1303
        %v1305 = vrcp.pop %v1283
        %v1306 = vmul.f32 1.0, %v1305
        %v1307 = vrcp.pop %v1284
        %v1308 = vmul.f32 1.0, %v1307
        %v1309 = vrcp.pop %v1285
        %v1310 = vmul.f32 1.0, %v1309
        %v1311 = vrcp.pop %v1286
        %v1312 = vmul.f32 1.0, %v1311
        %v1313 = vrcp.pop %v1287
        %v1314 = vmul.f32 1.0, %v1313
        %v1315 = vrcp.pop %v1288
        %v1316 = vmul.f32 1.0, %v1315
        %v1317 = vrcp.pop %v1289
        %v1318 = vmul.f32 1.0, %v1317
        %v1319 = vrcp.pop %v1290
        %v1320 = vmul.f32 1.0, %v1319
        %v1321 = vrcp.pop %v1291
        %v1322 = vmul.f32 1.0, %v1321
        %v1323 = vrcp.pop %v1292
        %v1324 = vmul.f32 1.0, %v1323
        %v1325 = vmul.f32 %v1213, %v1294
        %v1326 = vmul.f32 %v1214, %v1296
        %v1327 = vmul.f32 %v1215, %v1298
        %v1328 = vmul.f32 %v1216, %v1300
        %v1329 = vmul.f32 %v1217, %v1302
        %v1330 = vmul.f32 %v1218, %v1304
        %v1331 = vmul.f32 %v1219, %v1306
        %v1332 = vmul.f32 %v1220, %v1308
        %v1333 = vmul.f32 %v1221, %v1310
        %v1334 = vmul.f32 %v1222, %v1312
        %v1335 = vmul.f32 %v1223, %v1314
        %v1336 = vmul.f32 %v1224, %v1316
        %v1337 = vmul.f32 %v1225, %v1318
        %v1338 = vmul.f32 %v1226, %v1320
        %v1339 = vmul.f32 %v1227, %v1322
        %v1340 = vmul.f32 %v1228, %v1324
        %v1341 = vlaneseq
        %v1342 = vshrl.u32 %v1341, 7
        %v1343 = vsub.s32 0, %v1342
        %v1344 = vrot.slane %v737, %v1343
        %v1346 = vsel %vm738, %v1325, 0
        %v1349 = vsel %vm738, %v1326, 0
        %v1352 = vsel %vm738, %v1327, 0
        %v1355 = vsel %vm738, %v1328, 0
        %v1358 = vsel %vm738, %v1329, 0
        %v1361 = vsel %vm738, %v1330, 0
        %v1364 = vsel %vm738, %v1331, 0
        %v1367 = vsel %vm738, %v1332, 0
        %v1370 = vsel %vm738, %v1333, 0
        %v1373 = vsel %vm738, %v1334, 0
        %v1376 = vsel %vm738, %v1335, 0
        %v1379 = vsel %vm738, %v1336, 0
        %v1382 = vsel %vm738, %v1337, 0
        %v1385 = vsel %vm738, %v1338, 0
        %v1388 = vsel %vm738, %v1339, 0
        %v1391 = vsel %vm738, %v1340, 0
        %1393 = vmatprep.subr.mxu0 0.0
        %1394 = vmatpush1.msra.mxu0 0.0
        %1395 = vmatprep.subr.mxu0 0.0
        %1396 = vmatpush1.msra.mxu0 0.0
        %1397 = vmatprep.subr.mxu0 0.0
        %1398 = vmatpush1.msra.mxu0 0.0
        %1399 = vmatprep.subr.mxu0 0.0
        %1400 = vmatpush1.msra.mxu0 0.0
        %1401 = vmatprep.subr.mxu0 0.0
        %1402 = vmatpush1.msra.mxu0 0.0
        %1403 = vmatprep.subr.mxu0 0.0
        %1404 = vmatpush1.msra.mxu0 0.0
        %1405 = vmatprep.subr.mxu0 0.0
        %1406 = vmatpush1.msra.mxu0 0.0
        %1407 = vmatprep.subr.mxu0 0.0
        %1408 = vmatpush1.msra.mxu0 0.0
        %1409 = vmatprep.subr.mxu0 0.0
        %1410 = vmatpush1.msra.mxu0 %v735
        %1411 = vmatprep.subr.mxu0 0.0
        %1412 = vmatpush1.msra.mxu0 %v734
        %1413 = vmatprep.subr.mxu0 0.0
        %1414 = vmatpush1.msra.mxu0 %v733
        %1415 = vmatprep.subr.mxu0 0.0
        %1416 = vmatpush1.msra.mxu0 %v732
        %1417 = vmatprep.subr.mxu0 0.0
        %1418 = vmatpush1.msra.mxu0 %v731
        %1419 = vmatprep.subr.mxu0 0.0
        %1420 = vmatpush1.msra.mxu0 %v730
        %1421 = vmatprep.subr.mxu0 0.0
        %1422 = vmatpush1.msra.mxu0 %v729
        %1423 = vmatprep.subr.mxu0 0.0
        %1424 = vmatpush1.msra.mxu0 %v728
        %1425 = vmatprep.subr.mxu0 0.0
        %1426 = vmatpush2.msra.mxu0 0.0
        %1427 = vmatprep.subr.mxu0 0.0
        %1428 = vmatpush2.msra.mxu0 0.0
        %1429 = vmatprep.subr.mxu0 0.0
        %1430 = vmatpush2.msra.mxu0 0.0
        %1431 = vmatprep.subr.mxu0 0.0
        %1432 = vmatpush2.msra.mxu0 0.0
        %1433 = vmatprep.subr.mxu0 0.0
        %1434 = vmatpush2.msra.mxu0 0.0
        %1435 = vmatprep.subr.mxu0 0.0
        %1436 = vmatpush2.msra.mxu0 0.0
        %1437 = vmatprep.subr.mxu0 0.0
        %1438 = vmatpush2.msra.mxu0 0.0
        %1439 = vmatprep.subr.mxu0 0.0
        %1440 = vmatpush2.msra.mxu0 0.0
        %1441 = vmatprep.subr.mxu0 0.0
        %1442 = vmatpush2.msra.mxu0 0.0
        %1443 = vmatprep.subr.mxu0 0.0
        %1444 = vmatpush2.msra.mxu0 0.0
        %1445 = vmatprep.subr.mxu0 0.0
        %1446 = vmatpush2.msra.mxu0 0.0
        %1447 = vmatprep.subr.mxu0 0.0
        %1448 = vmatpush2.msra.mxu0 0.0
        %1449 = vmatprep.subr.mxu0 0.0
        %1450 = vmatpush2.msra.mxu0 0.0
        %1451 = vmatprep.subr.mxu0 0.0
        %1452 = vmatpush2.msra.mxu0 0.0
        %1453 = vmatprep.subr.mxu0 0.0
        %1454 = vmatpush2.msra.mxu0 0.0
        %1455 = vmatprep.subr.mxu0 0.0
        %1456 = vmatpush2.msra.mxu0 0.0
        %1457 = vmatprep.mubr.f32.mxu0 0.0
        %1458 = vmatmul.mubr.f32.gmra.mxu0 %v1346
        %v1459 = vpop.f32.mrf.mxu0
        %v1460 = vadd.f32 %v1344, %v1459
        %v1461 = vpop.f32.mrf.mxu0
        %1462 = vmatprep.mubr.f32.mxu0 0.0
        %1463 = vmatmul.mubr.f32.gmra.mxu0 %v1349
        %v1464 = vpop.f32.mrf.mxu0
        %v1465 = vadd.f32 %v1344, %v1464
        %v1466 = vpop.f32.mrf.mxu0
        %1467 = vmatprep.mubr.f32.mxu0 0.0
        %1468 = vmatmul.mubr.f32.gmra.mxu0 %v1352
        %v1469 = vpop.f32.mrf.mxu0
        %v1470 = vadd.f32 %v1344, %v1469
        %v1471 = vpop.f32.mrf.mxu0
        %1472 = vmatprep.mubr.f32.mxu0 0.0
        %1473 = vmatmul.mubr.f32.gmra.mxu0 %v1355
        %v1474 = vpop.f32.mrf.mxu0
        %v1475 = vadd.f32 %v1344, %v1474
        %v1476 = vpop.f32.mrf.mxu0
        %1477 = vmatprep.mubr.f32.mxu0 0.0
        %1478 = vmatmul.mubr.f32.gmra.mxu0 %v1358
        %v1479 = vpop.f32.mrf.mxu0
        %v1480 = vadd.f32 %v1344, %v1479
        %v1481 = vpop.f32.mrf.mxu0
        %1482 = vmatprep.mubr.f32.mxu0 0.0
        %1483 = vmatmul.mubr.f32.gmra.mxu0 %v1361
        %v1484 = vpop.f32.mrf.mxu0
        %v1485 = vadd.f32 %v1344, %v1484
        %v1486 = vpop.f32.mrf.mxu0
        %1487 = vmatprep.mubr.f32.mxu0 0.0
        %1488 = vmatmul.mubr.f32.gmra.mxu0 %v1364
        %v1489 = vpop.f32.mrf.mxu0
        %v1490 = vadd.f32 %v1344, %v1489
        %v1491 = vpop.f32.mrf.mxu0
        %1492 = vmatprep.mubr.f32.mxu0 0.0
        %1493 = vmatmul.mubr.f32.gmra.mxu0 %v1367
        %v1494 = vpop.f32.mrf.mxu0
        %v1495 = vadd.f32 %v1344, %v1494
        %v1496 = vpop.f32.mrf.mxu0
        %1497 = vmatprep.mubr.f32.mxu0 0.0
        %1498 = vmatmul.mubr.f32.gmra.mxu0 %v1370
        %v1499 = vpop.f32.mrf.mxu0
        %v1500 = vadd.f32 %v1344, %v1499
        %v1501 = vpop.f32.mrf.mxu0
        %1502 = vmatprep.mubr.f32.mxu0 0.0
        %1503 = vmatmul.mubr.f32.gmra.mxu0 %v1373
        %v1504 = vpop.f32.mrf.mxu0
        %v1505 = vadd.f32 %v1344, %v1504
        %v1506 = vpop.f32.mrf.mxu0
        %1507 = vmatprep.mubr.f32.mxu0 0.0
        %1508 = vmatmul.mubr.f32.gmra.mxu0 %v1376
        %v1509 = vpop.f32.mrf.mxu0
        %v1510 = vadd.f32 %v1344, %v1509
        %v1511 = vpop.f32.mrf.mxu0
        %1512 = vmatprep.mubr.f32.mxu0 0.0
        %1513 = vmatmul.mubr.f32.gmra.mxu0 %v1379
        %v1514 = vpop.f32.mrf.mxu0
        %v1515 = vadd.f32 %v1344, %v1514
        %v1516 = vpop.f32.mrf.mxu0
        %1517 = vmatprep.mubr.f32.mxu0 0.0
        %1518 = vmatmul.mubr.f32.gmra.mxu0 %v1382
        %v1519 = vpop.f32.mrf.mxu0
        %v1520 = vadd.f32 %v1344, %v1519
        %v1521 = vpop.f32.mrf.mxu0
        %1522 = vmatprep.mubr.f32.mxu0 0.0
        %1523 = vmatmul.mubr.f32.gmra.mxu0 %v1385
        %v1524 = vpop.f32.mrf.mxu0
        %v1525 = vadd.f32 %v1344, %v1524
        %v1526 = vpop.f32.mrf.mxu0
        %1527 = vmatprep.mubr.f32.mxu0 0.0
        %1528 = vmatmul.mubr.f32.gmra.mxu0 %v1388
        %v1529 = vpop.f32.mrf.mxu0
        %v1530 = vadd.f32 %v1344, %v1529
        %v1531 = vpop.f32.mrf.mxu0
        %1532 = vmatprep.mubr.f32.mxu0 0.0
        %1533 = vmatmul.mubr.f32.gmra.mxu0 %v1391
        %v1534 = vpop.f32.mrf.mxu0
        %v1535 = vadd.f32 %v1344, %v1534
        %v1536 = vpop.f32.mrf.mxu0
        %1537 = vdwg.mxu0
        %v1538 = vld [vmem:[%s8] sm:$0x1]
        %v1539 = vunpack.c.l.bf16 %v1538
        %v1540 = vld [vmem:[%s9] sm:$0x1]
        %v1541 = vunpack.c.l.bf16 %v1540
        %v1542 = vld [vmem:[%s10] sm:$0xf]
        %v1543 = vld [vmem:[%s10 + $0x4] sm:$0xf]
        %v1544 = vld [vmem:[%s10 + $0x8] sm:$0xf]
        %v1545 = vld [vmem:[%s10 + $0xc] sm:$0xf]
        %v1546 = vld [vmem:[%s10 + $0x10] sm:$0xf]
        %v1547 = vld [vmem:[%s10 + $0x14] sm:$0xf]
        %v1548 = vld [vmem:[%s10 + $0x18] sm:$0xf]
        %v1549 = vld [vmem:[%s10 + $0x1c] sm:$0xf]
        %v1550 = vunpack.c.l.bf16 %v1542
        %v1551 = vunpack.c.l.bf16 %v1543
        %v1552 = vunpack.c.l.bf16 %v1544
        %v1553 = vunpack.c.l.bf16 %v1545
        %v1554 = vunpack.c.l.bf16 %v1546
        %v1555 = vunpack.c.l.bf16 %v1547
        %v1556 = vunpack.c.l.bf16 %v1548
        %v1557 = vunpack.c.l.bf16 %v1549
        %v1558 = vld [vmem:[%s11] sm:$0x1]
        %v1559 = vunpack.c.l.bf16 %v1558
        %v1561 = vsel %vm738, %v1460, 0
        %v1564 = vsel %vm738, %v1465, 0
        %v1567 = vsel %vm738, %v1470, 0
        %v1570 = vsel %vm738, %v1475, 0
        %v1573 = vsel %vm738, %v1480, 0
        %v1576 = vsel %vm738, %v1485, 0
        %v1579 = vsel %vm738, %v1490, 0
        %v1582 = vsel %vm738, %v1495, 0
        %v1585 = vsel %vm738, %v1500, 0
        %v1588 = vsel %vm738, %v1505, 0
        %v1591 = vsel %vm738, %v1510, 0
        %v1594 = vsel %vm738, %v1515, 0
        %v1597 = vsel %vm738, %v1520, 0
        %v1600 = vsel %vm738, %v1525, 0
        %v1603 = vsel %vm738, %v1530, 0
        %v1606 = vsel %vm738, %v1535, 0
        %1608 = vmatprep.subr.mxu0 0.0
        %1609 = vmatpush1.msra.mxu0 0.0
        %1610 = vmatprep.subr.mxu0 0.0
        %1611 = vmatpush1.msra.mxu0 0.0
        %1612 = vmatprep.subr.mxu0 0.0
        %1613 = vmatpush1.msra.mxu0 0.0
        %1614 = vmatprep.subr.mxu0 0.0
        %1615 = vmatpush1.msra.mxu0 0.0
        %1616 = vmatprep.subr.mxu0 0.0
        %1617 = vmatpush1.msra.mxu0 0.0
        %1618 = vmatprep.subr.mxu0 0.0
        %1619 = vmatpush1.msra.mxu0 0.0
        %1620 = vmatprep.subr.mxu0 0.0
        %1621 = vmatpush1.msra.mxu0 0.0
        %1622 = vmatprep.subr.mxu0 0.0
        %1623 = vmatpush1.msra.mxu0 0.0
        %1624 = vmatprep.subr.mxu0 0.0
        %1625 = vmatpush1.msra.mxu0 %v715
        %1626 = vmatprep.subr.mxu0 0.0
        %1627 = vmatpush1.msra.mxu0 %v714
        %1628 = vmatprep.subr.mxu0 0.0
        %1629 = vmatpush1.msra.mxu0 %v713
        %1630 = vmatprep.subr.mxu0 0.0
        %1631 = vmatpush1.msra.mxu0 %v712
        %1632 = vmatprep.subr.mxu0 0.0
        %1633 = vmatpush1.msra.mxu0 %v711
        %1634 = vmatprep.subr.mxu0 0.0
        %1635 = vmatpush1.msra.mxu0 %v710
        %1636 = vmatprep.subr.mxu0 0.0
        %1637 = vmatpush1.msra.mxu0 %v709
        %1638 = vmatprep.subr.mxu0 0.0
        %1639 = vmatpush1.msra.mxu0 %v708
        %1640 = vmatprep.subr.mxu0 0.0
        %1641 = vmatpush2.msra.mxu0 0.0
        %1642 = vmatprep.subr.mxu0 0.0
        %1643 = vmatpush2.msra.mxu0 0.0
        %1644 = vmatprep.subr.mxu0 0.0
        %1645 = vmatpush2.msra.mxu0 0.0
        %1646 = vmatprep.subr.mxu0 0.0
        %1647 = vmatpush2.msra.mxu0 0.0
        %1648 = vmatprep.subr.mxu0 0.0
        %1649 = vmatpush2.msra.mxu0 0.0
        %1650 = vmatprep.subr.mxu0 0.0
        %1651 = vmatpush2.msra.mxu0 0.0
        %1652 = vmatprep.subr.mxu0 0.0
        %1653 = vmatpush2.msra.mxu0 0.0
        %1654 = vmatprep.subr.mxu0 0.0
        %1655 = vmatpush2.msra.mxu0 0.0
        %1656 = vmatprep.subr.mxu0 0.0
        %1657 = vmatpush2.msra.mxu0 0.0
        %1658 = vmatprep.subr.mxu0 0.0
        %1659 = vmatpush2.msra.mxu0 0.0
        %1660 = vmatprep.subr.mxu0 0.0
        %1661 = vmatpush2.msra.mxu0 0.0
        %1662 = vmatprep.subr.mxu0 0.0
        %1663 = vmatpush2.msra.mxu0 0.0
        %1664 = vmatprep.subr.mxu0 0.0
        %1665 = vmatpush2.msra.mxu0 0.0
        %1666 = vmatprep.subr.mxu0 0.0
        %1667 = vmatpush2.msra.mxu0 0.0
        %1668 = vmatprep.subr.mxu0 0.0
        %1669 = vmatpush2.msra.mxu0 0.0
        %1670 = vmatprep.subr.mxu0 0.0
        %1671 = vmatpush2.msra.mxu0 0.0
        %1672 = vmatprep.mubr.f32.mxu0 0.0
        %1673 = vmatmul.mubr.f32.gmra.mxu0 %v1561
        %v1674 = vpop.f32.mrf.mxu0
        %v1675 = vadd.f32 0.0, %v1674
        %v1676 = vpop.f32.mrf.mxu0
        %1677 = vmatprep.mubr.f32.mxu0 0.0
        %1678 = vmatmul.mubr.f32.gmra.mxu0 %v1564
        %v1679 = vpop.f32.mrf.mxu0
        %v1680 = vadd.f32 0.0, %v1679
        %v1681 = vpop.f32.mrf.mxu0
        %1682 = vmatprep.mubr.f32.mxu0 0.0
        %1683 = vmatmul.mubr.f32.gmra.mxu0 %v1567
        %v1684 = vpop.f32.mrf.mxu0
        %v1685 = vadd.f32 0.0, %v1684
        %v1686 = vpop.f32.mrf.mxu0
        %1687 = vmatprep.mubr.f32.mxu0 0.0
        %1688 = vmatmul.mubr.f32.gmra.mxu0 %v1570
        %v1689 = vpop.f32.mrf.mxu0
        %v1690 = vadd.f32 0.0, %v1689
        %v1691 = vpop.f32.mrf.mxu0
        %1692 = vmatprep.mubr.f32.mxu0 0.0
        %1693 = vmatmul.mubr.f32.gmra.mxu0 %v1573
        %v1694 = vpop.f32.mrf.mxu0
        %v1695 = vadd.f32 0.0, %v1694
        %v1696 = vpop.f32.mrf.mxu0
        %1697 = vmatprep.mubr.f32.mxu0 0.0
        %1698 = vmatmul.mubr.f32.gmra.mxu0 %v1576
        %v1699 = vpop.f32.mrf.mxu0
        %v1700 = vadd.f32 0.0, %v1699
        %v1701 = vpop.f32.mrf.mxu0
        %1702 = vmatprep.mubr.f32.mxu0 0.0
        %1703 = vmatmul.mubr.f32.gmra.mxu0 %v1579
        %v1704 = vpop.f32.mrf.mxu0
        %v1705 = vadd.f32 0.0, %v1704
        %v1706 = vpop.f32.mrf.mxu0
        %1707 = vmatprep.mubr.f32.mxu0 0.0
        %1708 = vmatmul.mubr.f32.gmra.mxu0 %v1582
        %v1709 = vpop.f32.mrf.mxu0
        %v1710 = vadd.f32 0.0, %v1709
        %v1711 = vpop.f32.mrf.mxu0
        %1712 = vmatprep.mubr.f32.mxu0 0.0
        %1713 = vmatmul.mubr.f32.gmra.mxu0 %v1585
        %v1714 = vpop.f32.mrf.mxu0
        %v1715 = vadd.f32 0.0, %v1714
        %v1716 = vpop.f32.mrf.mxu0
        %1717 = vmatprep.mubr.f32.mxu0 0.0
        %1718 = vmatmul.mubr.f32.gmra.mxu0 %v1588
        %v1719 = vpop.f32.mrf.mxu0
        %v1720 = vadd.f32 0.0, %v1719
        %v1721 = vpop.f32.mrf.mxu0
        %1722 = vmatprep.mubr.f32.mxu0 0.0
        %1723 = vmatmul.mubr.f32.gmra.mxu0 %v1591
        %v1724 = vpop.f32.mrf.mxu0
        %v1725 = vadd.f32 0.0, %v1724
        %v1726 = vpop.f32.mrf.mxu0
        %1727 = vmatprep.mubr.f32.mxu0 0.0
        %1728 = vmatmul.mubr.f32.gmra.mxu0 %v1594
        %v1729 = vpop.f32.mrf.mxu0
        %v1730 = vadd.f32 0.0, %v1729
        %v1731 = vpop.f32.mrf.mxu0
        %1732 = vmatprep.mubr.f32.mxu0 0.0
        %1733 = vmatmul.mubr.f32.gmra.mxu0 %v1597
        %v1734 = vpop.f32.mrf.mxu0
        %v1735 = vadd.f32 0.0, %v1734
        %v1736 = vpop.f32.mrf.mxu0
        %1737 = vmatprep.mubr.f32.mxu0 0.0
        %1738 = vmatmul.mubr.f32.gmra.mxu0 %v1600
        %v1739 = vpop.f32.mrf.mxu0
        %v1740 = vadd.f32 0.0, %v1739
        %v1741 = vpop.f32.mrf.mxu0
        %1742 = vmatprep.mubr.f32.mxu0 0.0
        %1743 = vmatmul.mubr.f32.gmra.mxu0 %v1603
        %v1744 = vpop.f32.mrf.mxu0
        %v1745 = vadd.f32 0.0, %v1744
        %v1746 = vpop.f32.mrf.mxu0
        %1747 = vmatprep.mubr.f32.mxu0 0.0
        %1748 = vmatmul.mubr.f32.gmra.mxu0 %v1606
        %v1749 = vpop.f32.mrf.mxu0
        %v1750 = vadd.f32 0.0, %v1749
        %v1751 = vpop.f32.mrf.mxu0
        %1752 = vdwg.mxu0
        %v1753 = vsub.f32 %v1460, %v1675
        %v1754 = vsub.f32 %v1465, %v1680
        %v1755 = vsub.f32 %v1470, %v1685
        %v1756 = vsub.f32 %v1475, %v1690
        %v1757 = vsub.f32 %v1480, %v1695
        %v1758 = vsub.f32 %v1485, %v1700
        %v1759 = vsub.f32 %v1490, %v1705
        %v1760 = vsub.f32 %v1495, %v1710
        %v1761 = vsub.f32 %v1500, %v1715
        %v1762 = vsub.f32 %v1505, %v1720
        %v1763 = vsub.f32 %v1510, %v1725
        %v1764 = vsub.f32 %v1515, %v1730
        %v1765 = vsub.f32 %v1520, %v1735
        %v1766 = vsub.f32 %v1525, %v1740
        %v1767 = vsub.f32 %v1530, %v1745
        %v1768 = vsub.f32 %v1535, %v1750
        %v1769 = vmul.f32 %v1753, %v1753
        %v1770 = vmul.f32 %v1754, %v1754
        %v1771 = vmul.f32 %v1755, %v1755
        %v1772 = vmul.f32 %v1756, %v1756
        %v1773 = vmul.f32 %v1757, %v1757
        %v1774 = vmul.f32 %v1758, %v1758
        %v1775 = vmul.f32 %v1759, %v1759
        %v1776 = vmul.f32 %v1760, %v1760
        %v1777 = vmul.f32 %v1761, %v1761
        %v1778 = vmul.f32 %v1762, %v1762
        %v1779 = vmul.f32 %v1763, %v1763
        %v1780 = vmul.f32 %v1764, %v1764
        %v1781 = vmul.f32 %v1765, %v1765
        %v1782 = vmul.f32 %v1766, %v1766
        %v1783 = vmul.f32 %v1767, %v1767
        %v1784 = vmul.f32 %v1768, %v1768
        %v1786 = vsel %vm738, %v1769, 0
        %v1789 = vsel %vm738, %v1770, 0
        %v1792 = vsel %vm738, %v1771, 0
        %v1795 = vsel %vm738, %v1772, 0
        %v1798 = vsel %vm738, %v1773, 0
        %v1801 = vsel %vm738, %v1774, 0
        %v1804 = vsel %vm738, %v1775, 0
        %v1807 = vsel %vm738, %v1776, 0
        %v1810 = vsel %vm738, %v1777, 0
        %v1813 = vsel %vm738, %v1778, 0
        %v1816 = vsel %vm738, %v1779, 0
        %v1819 = vsel %vm738, %v1780, 0
        %v1822 = vsel %vm738, %v1781, 0
        %v1825 = vsel %vm738, %v1782, 0
        %v1828 = vsel %vm738, %v1783, 0
        %v1831 = vsel %vm738, %v1784, 0
        %1833 = vmatprep.subr.mxu0 0.0
        %1834 = vmatpush1.msra.mxu0 0.0
        %1835 = vmatprep.subr.mxu0 0.0
        %1836 = vmatpush1.msra.mxu0 0.0
        %1837 = vmatprep.subr.mxu0 0.0
        %1838 = vmatpush1.msra.mxu0 0.0
        %1839 = vmatprep.subr.mxu0 0.0
        %1840 = vmatpush1.msra.mxu0 0.0
        %1841 = vmatprep.subr.mxu0 0.0
        %1842 = vmatpush1.msra.mxu0 0.0
        %1843 = vmatprep.subr.mxu0 0.0
        %1844 = vmatpush1.msra.mxu0 0.0
        %1845 = vmatprep.subr.mxu0 0.0
        %1846 = vmatpush1.msra.mxu0 0.0
        %1847 = vmatprep.subr.mxu0 0.0
        %1848 = vmatpush1.msra.mxu0 0.0
        %1849 = vmatprep.subr.mxu0 0.0
        %1850 = vmatpush1.msra.mxu0 %v715
        %1851 = vmatprep.subr.mxu0 0.0
        %1852 = vmatpush1.msra.mxu0 %v714
        %1853 = vmatprep.subr.mxu0 0.0
        %1854 = vmatpush1.msra.mxu0 %v713
        %1855 = vmatprep.subr.mxu0 0.0
        %1856 = vmatpush1.msra.mxu0 %v712
        %1857 = vmatprep.subr.mxu0 0.0
        %1858 = vmatpush1.msra.mxu0 %v711
        %1859 = vmatprep.subr.mxu0 0.0
        %1860 = vmatpush1.msra.mxu0 %v710
        %1861 = vmatprep.subr.mxu0 0.0
        %1862 = vmatpush1.msra.mxu0 %v709
        %1863 = vmatprep.subr.mxu0 0.0
        %1864 = vmatpush1.msra.mxu0 %v708
        %1865 = vmatprep.subr.mxu0 0.0
        %1866 = vmatpush2.msra.mxu0 0.0
        %1867 = vmatprep.subr.mxu0 0.0
        %1868 = vmatpush2.msra.mxu0 0.0
        %1869 = vmatprep.subr.mxu0 0.0
        %1870 = vmatpush2.msra.mxu0 0.0
        %1871 = vmatprep.subr.mxu0 0.0
        %1872 = vmatpush2.msra.mxu0 0.0
        %1873 = vmatprep.subr.mxu0 0.0
        %1874 = vmatpush2.msra.mxu0 0.0
        %1875 = vmatprep.subr.mxu0 0.0
        %1876 = vmatpush2.msra.mxu0 0.0
        %1877 = vmatprep.subr.mxu0 0.0
        %1878 = vmatpush2.msra.mxu0 0.0
        %1879 = vmatprep.subr.mxu0 0.0
        %1880 = vmatpush2.msra.mxu0 0.0
        %1881 = vmatprep.subr.mxu0 0.0
        %1882 = vmatpush2.msra.mxu0 0.0
        %1883 = vmatprep.subr.mxu0 0.0
        %1884 = vmatpush2.msra.mxu0 0.0
        %1885 = vmatprep.subr.mxu0 0.0
        %1886 = vmatpush2.msra.mxu0 0.0
        %1887 = vmatprep.subr.mxu0 0.0
        %1888 = vmatpush2.msra.mxu0 0.0
        %1889 = vmatprep.subr.mxu0 0.0
        %1890 = vmatpush2.msra.mxu0 0.0
        %1891 = vmatprep.subr.mxu0 0.0
        %1892 = vmatpush2.msra.mxu0 0.0
        %1893 = vmatprep.subr.mxu0 0.0
        %1894 = vmatpush2.msra.mxu0 0.0
        %1895 = vmatprep.subr.mxu0 0.0
        %1896 = vmatpush2.msra.mxu0 0.0
        %1897 = vmatprep.mubr.f32.mxu0 0.0
        %1898 = vmatmul.mubr.f32.gmra.mxu0 %v1786
        %v1899 = vpop.f32.mrf.mxu0
        %v1900 = vadd.f32 1e-05, %v1899
        %v1901 = vpop.f32.mrf.mxu0
        %1902 = vmatprep.mubr.f32.mxu0 0.0
        %1903 = vmatmul.mubr.f32.gmra.mxu0 %v1789
        %v1904 = vpop.f32.mrf.mxu0
        %v1905 = vadd.f32 1e-05, %v1904
        %v1906 = vpop.f32.mrf.mxu0
        %1907 = vmatprep.mubr.f32.mxu0 0.0
        %1908 = vmatmul.mubr.f32.gmra.mxu0 %v1792
        %v1909 = vpop.f32.mrf.mxu0
        %v1910 = vadd.f32 1e-05, %v1909
        %v1911 = vpop.f32.mrf.mxu0
        %1912 = vmatprep.mubr.f32.mxu0 0.0
        %1913 = vmatmul.mubr.f32.gmra.mxu0 %v1795
        %v1914 = vpop.f32.mrf.mxu0
        %v1915 = vadd.f32 1e-05, %v1914
        %v1916 = vpop.f32.mrf.mxu0
        %1917 = vmatprep.mubr.f32.mxu0 0.0
        %1918 = vmatmul.mubr.f32.gmra.mxu0 %v1798
        %v1919 = vpop.f32.mrf.mxu0
        %v1920 = vadd.f32 1e-05, %v1919
        %v1921 = vpop.f32.mrf.mxu0
        %1922 = vmatprep.mubr.f32.mxu0 0.0
        %1923 = vmatmul.mubr.f32.gmra.mxu0 %v1801
        %v1924 = vpop.f32.mrf.mxu0
        %v1925 = vadd.f32 1e-05, %v1924
        %v1926 = vpop.f32.mrf.mxu0
        %1927 = vmatprep.mubr.f32.mxu0 0.0
        %1928 = vmatmul.mubr.f32.gmra.mxu0 %v1804
        %v1929 = vpop.f32.mrf.mxu0
        %v1930 = vadd.f32 1e-05, %v1929
        %v1931 = vpop.f32.mrf.mxu0
        %1932 = vmatprep.mubr.f32.mxu0 0.0
        %1933 = vmatmul.mubr.f32.gmra.mxu0 %v1807
        %v1934 = vpop.f32.mrf.mxu0
        %v1935 = vadd.f32 1e-05, %v1934
        %v1936 = vpop.f32.mrf.mxu0
        %1937 = vmatprep.mubr.f32.mxu0 0.0
        %1938 = vmatmul.mubr.f32.gmra.mxu0 %v1810
        %v1939 = vpop.f32.mrf.mxu0
        %v1940 = vadd.f32 1e-05, %v1939
        %v1941 = vpop.f32.mrf.mxu0
        %1942 = vmatprep.mubr.f32.mxu0 0.0
        %1943 = vmatmul.mubr.f32.gmra.mxu0 %v1813
        %v1944 = vpop.f32.mrf.mxu0
        %v1945 = vadd.f32 1e-05, %v1944
        %v1946 = vpop.f32.mrf.mxu0
        %1947 = vmatprep.mubr.f32.mxu0 0.0
        %1948 = vmatmul.mubr.f32.gmra.mxu0 %v1816
        %v1949 = vpop.f32.mrf.mxu0
        %v1950 = vadd.f32 1e-05, %v1949
        %v1951 = vpop.f32.mrf.mxu0
        %1952 = vmatprep.mubr.f32.mxu0 0.0
        %1953 = vmatmul.mubr.f32.gmra.mxu0 %v1819
        %v1954 = vpop.f32.mrf.mxu0
        %v1955 = vadd.f32 1e-05, %v1954
        %v1956 = vpop.f32.mrf.mxu0
        %1957 = vmatprep.mubr.f32.mxu0 0.0
        %1958 = vmatmul.mubr.f32.gmra.mxu0 %v1822
        %v1959 = vpop.f32.mrf.mxu0
        %v1960 = vadd.f32 1e-05, %v1959
        %v1961 = vpop.f32.mrf.mxu0
        %1962 = vmatprep.mubr.f32.mxu0 0.0
        %1963 = vmatmul.mubr.f32.gmra.mxu0 %v1825
        %v1964 = vpop.f32.mrf.mxu0
        %v1965 = vadd.f32 1e-05, %v1964
        %v1966 = vpop.f32.mrf.mxu0
        %1967 = vmatprep.mubr.f32.mxu0 0.0
        %1968 = vmatmul.mubr.f32.gmra.mxu0 %v1828
        %v1969 = vpop.f32.mrf.mxu0
        %v1970 = vadd.f32 1e-05, %v1969
        %v1971 = vpop.f32.mrf.mxu0
        %1972 = vmatprep.mubr.f32.mxu0 0.0
        %1973 = vmatmul.mubr.f32.gmra.mxu0 %v1831
        %v1974 = vpop.f32.mrf.mxu0
        %v1975 = vadd.f32 1e-05, %v1974
        %v1976 = vpop.f32.mrf.mxu0
        %1977 = vdwg.mxu0
        %v1978 = vrsqrt.pop %v1900
        %v1979 = vrsqrt.pop %v1905
        %v1980 = vrsqrt.pop %v1910
        %v1981 = vrsqrt.pop %v1915
        %v1982 = vrsqrt.pop %v1920
        %v1983 = vrsqrt.pop %v1925
        %v1984 = vrsqrt.pop %v1930
        %v1985 = vrsqrt.pop %v1935
        %v1986 = vrsqrt.pop %v1940
        %v1987 = vrsqrt.pop %v1945
        %v1988 = vrsqrt.pop %v1950
        %v1989 = vrsqrt.pop %v1955
        %v1990 = vrsqrt.pop %v1960
        %v1991 = vrsqrt.pop %v1965
        %v1992 = vrsqrt.pop %v1970
        %v1993 = vrsqrt.pop %v1975
        %v1994 = vmul.f32 %v1753, %v1978
        %v1995 = vmul.f32 %v1754, %v1979
        %v1996 = vmul.f32 %v1755, %v1980
        %v1997 = vmul.f32 %v1756, %v1981
        %v1998 = vmul.f32 %v1757, %v1982
        %v1999 = vmul.f32 %v1758, %v1983
        %v2000 = vmul.f32 %v1759, %v1984
        %v2001 = vmul.f32 %v1760, %v1985
        %v2002 = vmul.f32 %v1761, %v1986
        %v2003 = vmul.f32 %v1762, %v1987
        %v2004 = vmul.f32 %v1763, %v1988
        %v2005 = vmul.f32 %v1764, %v1989
        %v2006 = vmul.f32 %v1765, %v1990
        %v2007 = vmul.f32 %v1766, %v1991
        %v2008 = vmul.f32 %v1767, %v1992
        %v2009 = vmul.f32 %v1768, %v1993
        %v2010 = vlaneseq
        %v2011 = vshrl.u32 %v2010, 7
        %v2012 = vsub.s32 0, %v2011
        %v2013 = vrot.slane %v1539, %v2012
        %v2014 = vmul.f32 %v1994, %v2013
        %v2015 = vmul.f32 %v1995, %v2013
        %v2016 = vmul.f32 %v1996, %v2013
        %v2017 = vmul.f32 %v1997, %v2013
        %v2018 = vmul.f32 %v1998, %v2013
        %v2019 = vmul.f32 %v1999, %v2013
        %v2020 = vmul.f32 %v2000, %v2013
        %v2021 = vmul.f32 %v2001, %v2013
        %v2022 = vmul.f32 %v2002, %v2013
        %v2023 = vmul.f32 %v2003, %v2013
        %v2024 = vmul.f32 %v2004, %v2013
        %v2025 = vmul.f32 %v2005, %v2013
        %v2026 = vmul.f32 %v2006, %v2013
        %v2027 = vmul.f32 %v2007, %v2013
        %v2028 = vmul.f32 %v2008, %v2013
        %v2029 = vmul.f32 %v2009, %v2013
        %v2030 = vlaneseq
        %v2031 = vshrl.u32 %v2030, 7
        %v2032 = vsub.s32 0, %v2031
        %v2033 = vrot.slane %v1541, %v2032
        %v2034 = vadd.f32 %v2014, %v2033
        %v2035 = vadd.f32 %v2015, %v2033
        %v2036 = vadd.f32 %v2016, %v2033
        %v2037 = vadd.f32 %v2017, %v2033
        %v2038 = vadd.f32 %v2018, %v2033
        %v2039 = vadd.f32 %v2019, %v2033
        %v2040 = vadd.f32 %v2020, %v2033
        %v2041 = vadd.f32 %v2021, %v2033
        %v2042 = vadd.f32 %v2022, %v2033
        %v2043 = vadd.f32 %v2023, %v2033
        %v2044 = vadd.f32 %v2024, %v2033
        %v2045 = vadd.f32 %v2025, %v2033
        %v2046 = vadd.f32 %v2026, %v2033
        %v2047 = vadd.f32 %v2027, %v2033
        %v2048 = vadd.f32 %v2028, %v2033
        %v2049 = vadd.f32 %v2029, %v2033
        %v2050 = vxor.u32 %v2034, 2147483648
        %v2051 = vxor.u32 %v2035, 2147483648
        %v2052 = vxor.u32 %v2036, 2147483648
        %v2053 = vxor.u32 %v2037, 2147483648
        %v2054 = vxor.u32 %v2038, 2147483648
        %v2055 = vxor.u32 %v2039, 2147483648
        %v2056 = vxor.u32 %v2040, 2147483648
        %v2057 = vxor.u32 %v2041, 2147483648
        %v2058 = vxor.u32 %v2042, 2147483648
        %v2059 = vxor.u32 %v2043, 2147483648
        %v2060 = vxor.u32 %v2044, 2147483648
        %v2061 = vxor.u32 %v2045, 2147483648
        %v2062 = vxor.u32 %v2046, 2147483648
        %v2063 = vxor.u32 %v2047, 2147483648
        %v2064 = vxor.u32 %v2048, 2147483648
        %v2065 = vxor.u32 %v2049, 2147483648
        %v2066 = vmul.f32 %v2050, 1.442695
        %v2067 = vpow.pop %v2066
        %v2068 = vmul.f32 %v2051, 1.442695
        %v2069 = vpow.pop %v2068
        %v2070 = vmul.f32 %v2052, 1.442695
        %v2071 = vpow.pop %v2070
        %v2072 = vmul.f32 %v2053, 1.442695
        %v2073 = vpow.pop %v2072
        %v2074 = vmul.f32 %v2054, 1.442695
        %v2075 = vpow.pop %v2074
        %v2076 = vmul.f32 %v2055, 1.442695
        %v2077 = vpow.pop %v2076
        %v2078 = vmul.f32 %v2056, 1.442695
        %v2079 = vpow.pop %v2078
        %v2080 = vmul.f32 %v2057, 1.442695
        %v2081 = vpow.pop %v2080
        %v2082 = vmul.f32 %v2058, 1.442695
        %v2083 = vpow.pop %v2082
        %v2084 = vmul.f32 %v2059, 1.442695
        %v2085 = vpow.pop %v2084
        %v2086 = vmul.f32 %v2060, 1.442695
        %v2087 = vpow.pop %v2086
        %v2088 = vmul.f32 %v2061, 1.442695
        %v2089 = vpow.pop %v2088
        %v2090 = vmul.f32 %v2062, 1.442695
        %v2091 = vpow.pop %v2090
        %v2092 = vmul.f32 %v2063, 1.442695
        %v2093 = vpow.pop %v2092
        %v2094 = vmul.f32 %v2064, 1.442695
        %v2095 = vpow.pop %v2094
        %v2096 = vmul.f32 %v2065, 1.442695
        %v2097 = vpow.pop %v2096
        %v2098 = vadd.f32 %v2067, 1.0
        %v2099 = vadd.f32 %v2069, 1.0
        %v2100 = vadd.f32 %v2071, 1.0
        %v2101 = vadd.f32 %v2073, 1.0
        %v2102 = vadd.f32 %v2075, 1.0
        %v2103 = vadd.f32 %v2077, 1.0
        %v2104 = vadd.f32 %v2079, 1.0
        %v2105 = vadd.f32 %v2081, 1.0
        %v2106 = vadd.f32 %v2083, 1.0
        %v2107 = vadd.f32 %v2085, 1.0
        %v2108 = vadd.f32 %v2087, 1.0
        %v2109 = vadd.f32 %v2089, 1.0
        %v2110 = vadd.f32 %v2091, 1.0
        %v2111 = vadd.f32 %v2093, 1.0
        %v2112 = vadd.f32 %v2095, 1.0
        %v2113 = vadd.f32 %v2097, 1.0
        %v2114 = vrcp.pop %v2098
        %v2115 = vmul.f32 1.0, %v2114
        %v2116 = vrcp.pop %v2099
        %v2117 = vmul.f32 1.0, %v2116
        %v2118 = vrcp.pop %v2100
        %v2119 = vmul.f32 1.0, %v2118
        %v2120 = vrcp.pop %v2101
        %v2121 = vmul.f32 1.0, %v2120
        %v2122 = vrcp.pop %v2102
        %v2123 = vmul.f32 1.0, %v2122
        %v2124 = vrcp.pop %v2103
        %v2125 = vmul.f32 1.0, %v2124
        %v2126 = vrcp.pop %v2104
        %v2127 = vmul.f32 1.0, %v2126
        %v2128 = vrcp.pop %v2105
        %v2129 = vmul.f32 1.0, %v2128
        %v2130 = vrcp.pop %v2106
        %v2131 = vmul.f32 1.0, %v2130
        %v2132 = vrcp.pop %v2107
        %v2133 = vmul.f32 1.0, %v2132
        %v2134 = vrcp.pop %v2108
        %v2135 = vmul.f32 1.0, %v2134
        %v2136 = vrcp.pop %v2109
        %v2137 = vmul.f32 1.0, %v2136
        %v2138 = vrcp.pop %v2110
        %v2139 = vmul.f32 1.0, %v2138
        %v2140 = vrcp.pop %v2111
        %v2141 = vmul.f32 1.0, %v2140
        %v2142 = vrcp.pop %v2112
        %v2143 = vmul.f32 1.0, %v2142
        %v2144 = vrcp.pop %v2113
        %v2145 = vmul.f32 1.0, %v2144
        %v2146 = vmul.f32 %v2034, %v2115
        %v2147 = vmul.f32 %v2035, %v2117
        %v2148 = vmul.f32 %v2036, %v2119
        %v2149 = vmul.f32 %v2037, %v2121
        %v2150 = vmul.f32 %v2038, %v2123
        %v2151 = vmul.f32 %v2039, %v2125
        %v2152 = vmul.f32 %v2040, %v2127
        %v2153 = vmul.f32 %v2041, %v2129
        %v2154 = vmul.f32 %v2042, %v2131
        %v2155 = vmul.f32 %v2043, %v2133
        %v2156 = vmul.f32 %v2044, %v2135
        %v2157 = vmul.f32 %v2045, %v2137
        %v2158 = vmul.f32 %v2046, %v2139
        %v2159 = vmul.f32 %v2047, %v2141
        %v2160 = vmul.f32 %v2048, %v2143
        %v2161 = vmul.f32 %v2049, %v2145
        %v2162 = vlaneseq
        %v2163 = vshrl.u32 %v2162, 7
        %v2164 = vsub.s32 0, %v2163
        %v2165 = vrot.slane %v1559, %v2164
        %v2167 = vsel %vm738, %v2146, 0
        %v2170 = vsel %vm738, %v2147, 0
        %v2173 = vsel %vm738, %v2148, 0
        %v2176 = vsel %vm738, %v2149, 0
        %v2179 = vsel %vm738, %v2150, 0
        %v2182 = vsel %vm738, %v2151, 0
        %v2185 = vsel %vm738, %v2152, 0
        %v2188 = vsel %vm738, %v2153, 0
        %v2191 = vsel %vm738, %v2154, 0
        %v2194 = vsel %vm738, %v2155, 0
        %v2197 = vsel %vm738, %v2156, 0
        %v2200 = vsel %vm738, %v2157, 0
        %v2203 = vsel %vm738, %v2158, 0
        %v2206 = vsel %vm738, %v2159, 0
        %v2209 = vsel %vm738, %v2160, 0
        %v2212 = vsel %vm738, %v2161, 0
        %2214 = vmatprep.subr.mxu0 0.0
        %2215 = vmatpush1.msra.mxu0 0.0
        %2216 = vmatprep.subr.mxu0 0.0
        %2217 = vmatpush1.msra.mxu0 0.0
        %2218 = vmatprep.subr.mxu0 0.0
        %2219 = vmatpush1.msra.mxu0 0.0
        %2220 = vmatprep.subr.mxu0 0.0
        %2221 = vmatpush1.msra.mxu0 0.0
        %2222 = vmatprep.subr.mxu0 0.0
        %2223 = vmatpush1.msra.mxu0 0.0
        %2224 = vmatprep.subr.mxu0 0.0
        %2225 = vmatpush1.msra.mxu0 0.0
        %2226 = vmatprep.subr.mxu0 0.0
        %2227 = vmatpush1.msra.mxu0 0.0
        %2228 = vmatprep.subr.mxu0 0.0
        %2229 = vmatpush1.msra.mxu0 0.0
        %2230 = vmatprep.subr.mxu0 0.0
        %2231 = vmatpush1.msra.mxu0 %v1557
        %2232 = vmatprep.subr.mxu0 0.0
        %2233 = vmatpush1.msra.mxu0 %v1556
        %2234 = vmatprep.subr.mxu0 0.0
        %2235 = vmatpush1.msra.mxu0 %v1555
        %2236 = vmatprep.subr.mxu0 0.0
        %2237 = vmatpush1.msra.mxu0 %v1554
        %2238 = vmatprep.subr.mxu0 0.0
        %2239 = vmatpush1.msra.mxu0 %v1553
        %2240 = vmatprep.subr.mxu0 0.0
        %2241 = vmatpush1.msra.mxu0 %v1552
        %2242 = vmatprep.subr.mxu0 0.0
        %2243 = vmatpush1.msra.mxu0 %v1551
        %2244 = vmatprep.subr.mxu0 0.0
        %2245 = vmatpush1.msra.mxu0 %v1550
        %2246 = vmatprep.subr.mxu0 0.0
        %2247 = vmatpush2.msra.mxu0 0.0
        %2248 = vmatprep.subr.mxu0 0.0
        %2249 = vmatpush2.msra.mxu0 0.0
        %2250 = vmatprep.subr.mxu0 0.0
        %2251 = vmatpush2.msra.mxu0 0.0
        %2252 = vmatprep.subr.mxu0 0.0
        %2253 = vmatpush2.msra.mxu0 0.0
        %2254 = vmatprep.subr.mxu0 0.0
        %2255 = vmatpush2.msra.mxu0 0.0
        %2256 = vmatprep.subr.mxu0 0.0
        %2257 = vmatpush2.msra.mxu0 0.0
        %2258 = vmatprep.subr.mxu0 0.0
        %2259 = vmatpush2.msra.mxu0 0.0
        %2260 = vmatprep.subr.mxu0 0.0
        %2261 = vmatpush2.msra.mxu0 0.0
        %2262 = vmatprep.subr.mxu0 0.0
        %2263 = vmatpush2.msra.mxu0 0.0
        %2264 = vmatprep.subr.mxu0 0.0
        %2265 = vmatpush2.msra.mxu0 0.0
        %2266 = vmatprep.subr.mxu0 0.0
        %2267 = vmatpush2.msra.mxu0 0.0
        %2268 = vmatprep.subr.mxu0 0.0
        %2269 = vmatpush2.msra.mxu0 0.0
        %2270 = vmatprep.subr.mxu0 0.0
        %2271 = vmatpush2.msra.mxu0 0.0
        %2272 = vmatprep.subr.mxu0 0.0
        %2273 = vmatpush2.msra.mxu0 0.0
        %2274 = vmatprep.subr.mxu0 0.0
        %2275 = vmatpush2.msra.mxu0 0.0
        %2276 = vmatprep.subr.mxu0 0.0
        %2277 = vmatpush2.msra.mxu0 0.0
        %2278 = vmatprep.mubr.f32.mxu0 0.0
        %2279 = vmatmul.mubr.f32.gmra.mxu0 %v2167
        %v2280 = vpop.f32.mrf.mxu0
        %v2281 = vadd.f32 %v2165, %v2280
        %v2282 = vpop.f32.mrf.mxu0
        %2283 = vmatprep.mubr.f32.mxu0 0.0
        %2284 = vmatmul.mubr.f32.gmra.mxu0 %v2170
        %v2285 = vpop.f32.mrf.mxu0
        %v2286 = vadd.f32 %v2165, %v2285
        %v2287 = vpop.f32.mrf.mxu0
        %2288 = vmatprep.mubr.f32.mxu0 0.0
        %2289 = vmatmul.mubr.f32.gmra.mxu0 %v2173
        %v2290 = vpop.f32.mrf.mxu0
        %v2291 = vadd.f32 %v2165, %v2290
        %v2292 = vpop.f32.mrf.mxu0
        %2293 = vmatprep.mubr.f32.mxu0 0.0
        %2294 = vmatmul.mubr.f32.gmra.mxu0 %v2176
        %v2295 = vpop.f32.mrf.mxu0
        %v2296 = vadd.f32 %v2165, %v2295
        %v2297 = vpop.f32.mrf.mxu0
        %2298 = vmatprep.mubr.f32.mxu0 0.0
        %2299 = vmatmul.mubr.f32.gmra.mxu0 %v2179
        %v2300 = vpop.f32.mrf.mxu0
        %v2301 = vadd.f32 %v2165, %v2300
        %v2302 = vpop.f32.mrf.mxu0
        %2303 = vmatprep.mubr.f32.mxu0 0.0
        %2304 = vmatmul.mubr.f32.gmra.mxu0 %v2182
        %v2305 = vpop.f32.mrf.mxu0
        %v2306 = vadd.f32 %v2165, %v2305
        %v2307 = vpop.f32.mrf.mxu0
        %2308 = vmatprep.mubr.f32.mxu0 0.0
        %2309 = vmatmul.mubr.f32.gmra.mxu0 %v2185
        %v2310 = vpop.f32.mrf.mxu0
        %v2311 = vadd.f32 %v2165, %v2310
        %v2312 = vpop.f32.mrf.mxu0
        %2313 = vmatprep.mubr.f32.mxu0 0.0
        %2314 = vmatmul.mubr.f32.gmra.mxu0 %v2188
        %v2315 = vpop.f32.mrf.mxu0
        %v2316 = vadd.f32 %v2165, %v2315
        %v2317 = vpop.f32.mrf.mxu0
        %2318 = vmatprep.mubr.f32.mxu0 0.0
        %2319 = vmatmul.mubr.f32.gmra.mxu0 %v2191
        %v2320 = vpop.f32.mrf.mxu0
        %v2321 = vadd.f32 %v2165, %v2320
        %v2322 = vpop.f32.mrf.mxu0
        %2323 = vmatprep.mubr.f32.mxu0 0.0
        %2324 = vmatmul.mubr.f32.gmra.mxu0 %v2194
        %v2325 = vpop.f32.mrf.mxu0
        %v2326 = vadd.f32 %v2165, %v2325
        %v2327 = vpop.f32.mrf.mxu0
        %2328 = vmatprep.mubr.f32.mxu0 0.0
        %2329 = vmatmul.mubr.f32.gmra.mxu0 %v2197
        %v2330 = vpop.f32.mrf.mxu0
        %v2331 = vadd.f32 %v2165, %v2330
        %v2332 = vpop.f32.mrf.mxu0
        %2333 = vmatprep.mubr.f32.mxu0 0.0
        %2334 = vmatmul.mubr.f32.gmra.mxu0 %v2200
        %v2335 = vpop.f32.mrf.mxu0
        %v2336 = vadd.f32 %v2165, %v2335
        %v2337 = vpop.f32.mrf.mxu0
        %2338 = vmatprep.mubr.f32.mxu0 0.0
        %2339 = vmatmul.mubr.f32.gmra.mxu0 %v2203
        %v2340 = vpop.f32.mrf.mxu0
        %v2341 = vadd.f32 %v2165, %v2340
        %v2342 = vpop.f32.mrf.mxu0
        %2343 = vmatprep.mubr.f32.mxu0 0.0
        %2344 = vmatmul.mubr.f32.gmra.mxu0 %v2206
        %v2345 = vpop.f32.mrf.mxu0
        %v2346 = vadd.f32 %v2165, %v2345
        %v2347 = vpop.f32.mrf.mxu0
        %2348 = vmatprep.mubr.f32.mxu0 0.0
        %2349 = vmatmul.mubr.f32.gmra.mxu0 %v2209
        %v2350 = vpop.f32.mrf.mxu0
        %v2351 = vadd.f32 %v2165, %v2350
        %v2352 = vpop.f32.mrf.mxu0
        %2353 = vmatprep.mubr.f32.mxu0 0.0
        %2354 = vmatmul.mubr.f32.gmra.mxu0 %v2212
        %v2355 = vpop.f32.mrf.mxu0
        %v2356 = vadd.f32 %v2165, %v2355
        %v2357 = vpop.f32.mrf.mxu0
        %2358 = vdwg.mxu0
        %v2359 = vxor.u32 %v2281, 2147483648
        %v2360 = vxor.u32 %v2286, 2147483648
        %v2361 = vxor.u32 %v2291, 2147483648
        %v2362 = vxor.u32 %v2296, 2147483648
        %v2363 = vxor.u32 %v2301, 2147483648
        %v2364 = vxor.u32 %v2306, 2147483648
        %v2365 = vxor.u32 %v2311, 2147483648
        %v2366 = vxor.u32 %v2316, 2147483648
        %v2367 = vxor.u32 %v2321, 2147483648
        %v2368 = vxor.u32 %v2326, 2147483648
        %v2369 = vxor.u32 %v2331, 2147483648
        %v2370 = vxor.u32 %v2336, 2147483648
        %v2371 = vxor.u32 %v2341, 2147483648
        %v2372 = vxor.u32 %v2346, 2147483648
        %v2373 = vxor.u32 %v2351, 2147483648
        %v2374 = vxor.u32 %v2356, 2147483648
        %v2375 = vmul.f32 %v2359, 1.442695
        %v2376 = vpow.pop %v2375
        %v2377 = vmul.f32 %v2360, 1.442695
        %v2378 = vpow.pop %v2377
        %v2379 = vmul.f32 %v2361, 1.442695
        %v2380 = vpow.pop %v2379
        %v2381 = vmul.f32 %v2362, 1.442695
        %v2382 = vpow.pop %v2381
        %v2383 = vmul.f32 %v2363, 1.442695
        %v2384 = vpow.pop %v2383
        %v2385 = vmul.f32 %v2364, 1.442695
        %v2386 = vpow.pop %v2385
        %v2387 = vmul.f32 %v2365, 1.442695
        %v2388 = vpow.pop %v2387
        %v2389 = vmul.f32 %v2366, 1.442695
        %v2390 = vpow.pop %v2389
        %v2391 = vmul.f32 %v2367, 1.442695
        %v2392 = vpow.pop %v2391
        %v2393 = vmul.f32 %v2368, 1.442695
        %v2394 = vpow.pop %v2393
        %v2395 = vmul.f32 %v2369, 1.442695
        %v2396 = vpow.pop %v2395
        %v2397 = vmul.f32 %v2370, 1.442695
        %v2398 = vpow.pop %v2397
        %v2399 = vmul.f32 %v2371, 1.442695
        %v2400 = vpow.pop %v2399
        %v2401 = vmul.f32 %v2372, 1.442695
        %v2402 = vpow.pop %v2401
        %v2403 = vmul.f32 %v2373, 1.442695
        %v2404 = vpow.pop %v2403
        %v2405 = vmul.f32 %v2374, 1.442695
        %v2406 = vpow.pop %v2405
        %v2407 = vadd.f32 %v2376, 1.0
        %v2408 = vadd.f32 %v2378, 1.0
        %v2409 = vadd.f32 %v2380, 1.0
        %v2410 = vadd.f32 %v2382, 1.0
        %v2411 = vadd.f32 %v2384, 1.0
        %v2412 = vadd.f32 %v2386, 1.0
        %v2413 = vadd.f32 %v2388, 1.0
        %v2414 = vadd.f32 %v2390, 1.0
        %v2415 = vadd.f32 %v2392, 1.0
        %v2416 = vadd.f32 %v2394, 1.0
        %v2417 = vadd.f32 %v2396, 1.0
        %v2418 = vadd.f32 %v2398, 1.0
        %v2419 = vadd.f32 %v2400, 1.0
        %v2420 = vadd.f32 %v2402, 1.0
        %v2421 = vadd.f32 %v2404, 1.0
        %v2422 = vadd.f32 %v2406, 1.0
        %v2423 = vrcp.pop %v2407
        %v2424 = vmul.f32 1.0, %v2423
        %v2425 = vrcp.pop %v2408
        %v2426 = vmul.f32 1.0, %v2425
        %v2427 = vrcp.pop %v2409
        %v2428 = vmul.f32 1.0, %v2427
        %v2429 = vrcp.pop %v2410
        %v2430 = vmul.f32 1.0, %v2429
        %v2431 = vrcp.pop %v2411
        %v2432 = vmul.f32 1.0, %v2431
        %v2433 = vrcp.pop %v2412
        %v2434 = vmul.f32 1.0, %v2433
        %v2435 = vrcp.pop %v2413
        %v2436 = vmul.f32 1.0, %v2435
        %v2437 = vrcp.pop %v2414
        %v2438 = vmul.f32 1.0, %v2437
        %v2439 = vrcp.pop %v2415
        %v2440 = vmul.f32 1.0, %v2439
        %v2441 = vrcp.pop %v2416
        %v2442 = vmul.f32 1.0, %v2441
        %v2443 = vrcp.pop %v2417
        %v2444 = vmul.f32 1.0, %v2443
        %v2445 = vrcp.pop %v2418
        %v2446 = vmul.f32 1.0, %v2445
        %v2447 = vrcp.pop %v2419
        %v2448 = vmul.f32 1.0, %v2447
        %v2449 = vrcp.pop %v2420
        %v2450 = vmul.f32 1.0, %v2449
        %v2451 = vrcp.pop %v2421
        %v2452 = vmul.f32 1.0, %v2451
        %v2453 = vrcp.pop %v2422
        %v2454 = vmul.f32 1.0, %v2453
        %v2455 = vmul.f32 %v2281, %v2424
        %v2456 = vmul.f32 %v2286, %v2426
        %v2457 = vmul.f32 %v2291, %v2428
        %v2458 = vmul.f32 %v2296, %v2430
        %v2459 = vmul.f32 %v2301, %v2432
        %v2460 = vmul.f32 %v2306, %v2434
        %v2461 = vmul.f32 %v2311, %v2436
        %v2462 = vmul.f32 %v2316, %v2438
        %v2463 = vmul.f32 %v2321, %v2440
        %v2464 = vmul.f32 %v2326, %v2442
        %v2465 = vmul.f32 %v2331, %v2444
        %v2466 = vmul.f32 %v2336, %v2446
        %v2467 = vmul.f32 %v2341, %v2448
        %v2468 = vmul.f32 %v2346, %v2450
        %v2469 = vmul.f32 %v2351, %v2452
        %v2470 = vmul.f32 %v2356, %v2454
        %v2471 = vld [vmem:[%s12] sm:$0xf]
        %v2472 = vld [vmem:[%s12 + $0x4] sm:$0xf]
        %v2473 = vld [vmem:[%s12 + $0x8] sm:$0xf]
        %v2474 = vld [vmem:[%s12 + $0xc] sm:$0xf]
        %v2475 = vunpack.c.l.bf16 %v2471
        %v2476 = vunpack.c.l.bf16 %v2472
        %v2477 = vunpack.c.l.bf16 %v2473
        %v2478 = vunpack.c.l.bf16 %v2474
        %v2479 = vld [vmem:[%s13] sm:$0xf]
        %v2480 = vld [vmem:[%s13 + $0x4] sm:$0xf]
        %v2481 = vld [vmem:[%s13 + $0x8] sm:$0xf]
        %v2482 = vld [vmem:[%s13 + $0xc] sm:$0xf]
        %v2483 = vunpack.c.l.bf16 %v2479
        %v2484 = vunpack.c.l.bf16 %v2480
        %v2485 = vunpack.c.l.bf16 %v2481
        %v2486 = vunpack.c.l.bf16 %v2482
        %2488 = vset.pattern.permute.xlu0 0
        %2489 = vperm.xlu0 %2488, %v2483
        %v2490 = vpop.permute.xlu0 %2489
        %2493 = vset.pattern.permute.xlu0 0
        %2494 = vperm.xlu0 %2493, %v2484
        %v2495 = vpop.permute.xlu0 %2494
        %2498 = vset.pattern.permute.xlu0 0
        %2499 = vperm.xlu0 %2498, %v2485
        %v2500 = vpop.permute.xlu0 %2499
        %2503 = vset.pattern.permute.xlu0 0
        %2504 = vperm.xlu0 %2503, %v2486
        %v2505 = vpop.permute.xlu0 %2504
        %v2508 = vsel %vm738, %v2475, 0
        %v2511 = vsel %vm738, %v2476, 0
        %v2514 = vsel %vm738, %v2477, 0
        %v2517 = vsel %vm738, %v2478, 0
        %v2520 = vsel %vm738, %v2455, 0
        %v2523 = vsel %vm738, %v2456, 0
        %v2526 = vsel %vm738, %v2457, 0
        %v2529 = vsel %vm738, %v2458, 0
        %v2532 = vsel %vm738, %v2459, 0
        %v2535 = vsel %vm738, %v2460, 0
        %v2538 = vsel %vm738, %v2461, 0
        %v2541 = vsel %vm738, %v2462, 0
        %v2544 = vsel %vm738, %v2463, 0
        %v2547 = vsel %vm738, %v2464, 0
        %v2550 = vsel %vm738, %v2465, 0
        %v2553 = vsel %vm738, %v2466, 0
        %v2556 = vsel %vm738, %v2467, 0
        %v2559 = vsel %vm738, %v2468, 0
        %v2562 = vsel %vm738, %v2469, 0
        %v2565 = vsel %vm738, %v2470, 0
        %2567 = vmatprep.subr.mxu0 0.0
        %2568 = vmatpush1.xpose.msra.mxu0 %v2565
        %2569 = vmatprep.subr.mxu0 0.0
        %2570 = vmatpush1.xpose.msra.mxu0 %v2562
        %2571 = vmatprep.subr.mxu0 0.0
        %2572 = vmatpush1.xpose.msra.mxu0 %v2559
        %2573 = vmatprep.subr.mxu0 0.0
        %2574 = vmatpush1.xpose.msra.mxu0 %v2556
        %2575 = vmatprep.subr.mxu0 0.0
        %2576 = vmatpush1.xpose.msra.mxu0 %v2553
        %2577 = vmatprep.subr.mxu0 0.0
        %2578 = vmatpush1.xpose.msra.mxu0 %v2550
        %2579 = vmatprep.subr.mxu0 0.0
        %2580 = vmatpush1.xpose.msra.mxu0 %v2547
        %2581 = vmatprep.subr.mxu0 0.0
        %2582 = vmatpush1.xpose.msra.mxu0 %v2544
        %2583 = vmatprep.subr.mxu0 0.0
        %2584 = vmatpush1.xpose.msra.mxu0 %v2541
        %2585 = vmatprep.subr.mxu0 0.0
        %2586 = vmatpush1.xpose.msra.mxu0 %v2538
        %2587 = vmatprep.subr.mxu0 0.0
        %2588 = vmatpush1.xpose.msra.mxu0 %v2535
        %2589 = vmatprep.subr.mxu0 0.0
        %2590 = vmatpush1.xpose.msra.mxu0 %v2532
        %2591 = vmatprep.subr.mxu0 0.0
        %2592 = vmatpush1.xpose.msra.mxu0 %v2529
        %2593 = vmatprep.subr.mxu0 0.0
        %2594 = vmatpush1.xpose.msra.mxu0 %v2526
        %2595 = vmatprep.subr.mxu0 0.0
        %2596 = vmatpush1.xpose.msra.mxu0 %v2523
        %2597 = vmatprep.subr.mxu0 0.0
        %2598 = vmatpush1.xpose.msra.mxu0 %v2520
        %2599 = vmatprep.subr.mxu0 0.0
        %2600 = vmatpush2.xpose.msra.mxu0 0.0
        %2601 = vmatprep.subr.mxu0 0.0
        %2602 = vmatpush2.xpose.msra.mxu0 0.0
        %2603 = vmatprep.subr.mxu0 0.0
        %2604 = vmatpush2.xpose.msra.mxu0 0.0
        %2605 = vmatprep.subr.mxu0 0.0
        %2606 = vmatpush2.xpose.msra.mxu0 0.0
        %2607 = vmatprep.subr.mxu0 0.0
        %2608 = vmatpush2.xpose.msra.mxu0 0.0
        %2609 = vmatprep.subr.mxu0 0.0
        %2610 = vmatpush2.xpose.msra.mxu0 0.0
        %2611 = vmatprep.subr.mxu0 0.0
        %2612 = vmatpush2.xpose.msra.mxu0 0.0
        %2613 = vmatprep.subr.mxu0 0.0
        %2614 = vmatpush2.xpose.msra.mxu0 0.0
        %2615 = vmatprep.subr.mxu0 0.0
        %2616 = vmatpush2.xpose.msra.mxu0 0.0
        %2617 = vmatprep.subr.mxu0 0.0
        %2618 = vmatpush2.xpose.msra.mxu0 0.0
        %2619 = vmatprep.subr.mxu0 0.0
        %2620 = vmatpush2.xpose.msra.mxu0 0.0
        %2621 = vmatprep.subr.mxu0 0.0
        %2622 = vmatpush2.xpose.msra.mxu0 0.0
        %2623 = vmatprep.subr.mxu0 0.0
        %2624 = vmatpush2.xpose.msra.mxu0 0.0
        %2625 = vmatprep.subr.mxu0 0.0
        %2626 = vmatpush2.xpose.msra.mxu0 0.0
        %2627 = vmatprep.subr.mxu0 0.0
        %2628 = vmatpush2.xpose.msra.mxu0 0.0
        %2629 = vmatprep.subr.mxu0 0.0
        %2630 = vmatpush2.xpose.msra.mxu0 0.0
        %2631 = vmatprep.mubr.f32.mxu0 0.0
        %2632 = vmatmul.mubr.f32.gmra.mxu0 %v2508
        %v2633 = vpop.f32.mrf.mxu0
        %v2634 = vadd.f32 %v2490, %v2633
        %v2635 = vpop.f32.mrf.mxu0
        %2636 = vmatprep.mubr.f32.mxu0 0.0
        %2637 = vmatmul.mubr.f32.gmra.mxu0 %v2511
        %v2638 = vpop.f32.mrf.mxu0
        %v2639 = vadd.f32 %v2495, %v2638
        %v2640 = vpop.f32.mrf.mxu0
        %2641 = vmatprep.mubr.f32.mxu0 0.0
        %2642 = vmatmul.mubr.f32.gmra.mxu0 %v2514
        %v2643 = vpop.f32.mrf.mxu0
        %v2644 = vadd.f32 %v2500, %v2643
        %v2645 = vpop.f32.mrf.mxu0
        %2646 = vmatprep.mubr.f32.mxu0 0.0
        %2647 = vmatmul.mubr.f32.gmra.mxu0 %v2517
        %v2648 = vpop.f32.mrf.mxu0
        %v2649 = vadd.f32 %v2505, %v2648
        %v2650 = vpop.f32.mrf.mxu0
        %2651 = vdwg.mxu0
        %v2652 = vpack.c.bf16 %v2639, %v2634
        %v2653 = vpack.c.bf16 %v2649, %v2644
        %v2656 = vunpack.c.l.b16 %v2652
        %v2657 = vunpack.c.h.b16 %v2652
        %v2658 = vunpack.c.l.b16 %v2653
        %v2659 = vunpack.c.h.b16 %v2653
        %v2660 = vpack.c.b16 %v2656, %v2656
        %v2661 = vpack.c.b16 %v2657, %v2657
        %v2662 = vpack.c.b16 %v2658, %v2658
        %v2663 = vpack.c.b16 %v2659, %v2659
        %2668 = vst [vmem:[%s461] sm:$0xf] %v2660
        %2669 = vst [vmem:[%s461 + $0x4] sm:$0xf] %v2661
        %2670 = vst [vmem:[%s461 + $0x8] sm:$0xf] %v2662
        %2671 = vst [vmem:[%s461 + $0xc] sm:$0xf] %v2663
        %s2672 = sand.u32 %s335, 1
        %s2673 = scalar_lea.sflag [#allocation3], %s2672
        %s2674 = sand.u32 %s335, 1
        %s2675 = smul.addr %s2674, 16
        %s2676 = scalar_lea.vmem [#allocation2], %s2675
        // Predicated region
        $region77: #{tpu_custom_call.1} parent=75 // pred_check
          %p2677 = pneg %p345
        $region78: #{tpu_custom_call.1} parent=75 // pred_check_branch
          %2679 = sbr.rel (%p2677) target = $region80
        $region79: #{tpu_custom_call.1} parent=75 // pred_region
          %s2681 = ssub.s32 256, 256
          %2682 = vsyncadd %s2673, %s2681
          %s2683 = smul.addr %s28, 64
          %s2684 = scalar_lea.hbm %s14, %s2683
          %s2685 = sshll.u32 %s2676, 4
          %s2686 = int_to_ptr.vmem [resolvable:$true] %s2685
          %2691 = dma.vmem_to_hbm [thread:$0]  %s2686, 256, %s2684, %s2673, 64, 128, 4
        $region80: #{tpu_custom_call.1} parent=75 // pred_fallthru
          _
      $region76: #{tpu_custom_call.1} parent=5 // pred_fallthru
        _
      %p2692 = scmp.le.s32.totalorder 2, %s23
      // Predicated region
      $region81: #{tpu_custom_call.1} parent=5 // pred_check
        %p2693 = pneg %p2692
      $region82: #{tpu_custom_call.1} parent=5 // pred_check_branch
        %2695 = sbr.rel (%p2693) target = $region84
      $region83: #{tpu_custom_call.1} parent=5 // pred_region
        %s2696 = ssub.s32 %s23, 2
        // Predicated region
        $region85: #{tpu_custom_call.1} parent=83 // pred_check
          %p2697 = pneg %p351
        $region86: #{tpu_custom_call.1} parent=83 // pred_check_branch
          %2699 = sbr.rel (%p2697) target = $region88
        $region87: #{tpu_custom_call.1} parent=83 // pred_region
          %s2700 = sand.u32 %s336, 1
          %s2701 = scalar_lea.sflag [#allocation3], %s2700
          %s2702 = sand.u32 %s336, 1
          %s2703 = smul.addr %s2702, 16
          %s2704 = scalar_lea.vmem [#allocation2], %s2703
          %2705 = dma.done %s2701, 256
        $region88: #{tpu_custom_call.1} parent=83 // pred_fallthru
          _
      $region84: #{tpu_custom_call.1} parent=5 // pred_fallthru
        _
    $region6: #{tpu_custom_call.1} parent=1 // loop_footer
      %s27 = sadd.s32 1, %s23
    $region7: #{tpu_custom_call.1} parent=1 // loop_footer_branch
      %22 = sbr.rel target = $region3
    $region8: #{tpu_custom_call.1} parent=1 // loop_exit
      _
    %2706 = vsyncpa [#allocation3], 1
    %s2707 = scalar_lea.sflag [#allocation3], 1
    %2708 = vsyncpa %s2707, 1

</llo_original>
